<compile_context>
chip_gen: v7x
topology: tpu7x:2x2x1
jax: 0.10.0
libtpu: 0.0.40
codegen_flags: <defaults>
</compile_context>

<pallas_src>
import jax
import jax.numpy as jnp
from jax import lax
from jax.experimental import pallas as pl
from jax.experimental.pallas import tpu as pltpu

HIDDEN = 512
N_ACT = 5
OUT_PAD = 128          # lane-dense padded head width
BN_EPS = 1e-5


def _dqn_kernel(x_ref,
                w1_ref, g1_ref, be1_ref,
                w3_ref, g3_ref, be3_ref,
                wo_ref, bo_ref,
                out_ref):
    x = x_ref[...]                                          # (B, Kp) f32
    inv_b = 1.0 / x.shape[0]

    def bn_relu(h, gamma, beta):
        # One-pass batch stats (biased variance), affine folded to scale/shift.
        mean = jnp.sum(h, axis=0, keepdims=True) * inv_b            # (1, 512)
        msq = jnp.sum(h * h, axis=0, keepdims=True) * inv_b         # (1, 512)
        var = jnp.maximum(msq - mean * mean, 0.0)
        scale = gamma * lax.rsqrt(var + BN_EPS)
        shift = beta - mean * scale
        return jnp.maximum(h * scale + shift, 0.0)

    # ---- fc1 (bias cancelled by train-mode BN) + BN + ReLU ----
    h = jnp.dot(x, w1_ref[...].astype(jnp.float32),
                preferred_element_type=jnp.float32)                 # (B, 512)
    h = bn_relu(h, g1_ref[...], be1_ref[...])

    # ---- fc3 (bias cancelled by train-mode BN) + BN + ReLU ----
    h = jnp.dot(h, w3_ref[...].astype(jnp.float32),
                preferred_element_type=jnp.float32)                 # (B, 512)
    h = bn_relu(h, g3_ref[...], be3_ref[...])

    # ---- out (lane-padded to 128 columns -> unmasked stores) ----
    o = jnp.dot(h, wo_ref[...].astype(jnp.float32),
                preferred_element_type=jnp.float32)                 # (B, 128)
    out_ref[...] = o + bo_ref[...]


@jax.jit
def dqn_forward(x, params):
    """x: (B, dim_obs) float32. params: output of prepare_params()."""
    B, d = x.shape
    assert B > 1, "train-mode BatchNorm needs batch size > 1"
    kp = params["w1"].shape[0]
    if d < kp:                       # zero-pad obs dim to lane-aligned width
        x = jnp.pad(x, ((0, 0), (0, kp - d)))

    args = (
        x,
        params["w1"], params["gamma1"], params["beta1"],
        params["w3"], params["gamma3"], params["beta3"],
        params["wo"], params["bo"],
    )
    vmem = pl.BlockSpec(memory_space=pltpu.MemorySpace.VMEM)
    flops = 2 * B * (kp * HIDDEN + HIDDEN * HIDDEN + HIDDEN * OUT_PAD)
    bytes_accessed = int(sum(a.size * a.dtype.itemsize for a in args)
                         + B * OUT_PAD * 4)

    out = pl.pallas_call(
        _dqn_kernel,
        out_shape=jax.ShapeDtypeStruct((B, OUT_PAD), jnp.float32),
        in_specs=[vmem] * len(args),
        out_specs=vmem,
        cost_estimate=pl.CostEstimate(
            flops=flops,
            transcendentals=2 * HIDDEN,          # two rsqrt passes over (1,512)
            bytes_accessed=bytes_accessed),
    )(*args)
    return out[:, :N_ACT]


def init_params(key, dim_obs):
    """Deterministic synthetic init (PyTorch-like uniform fan-in scaling)."""
    ks = jax.random.split(key, 6)

    def lin(kw, kb, fan_in, fan_out):
        bound = 1.0 / jnp.sqrt(fan_in)
        w = jax.random.uniform(kw, (fan_in, fan_out), jnp.float32, -bound, bound)
        b = jax.random.uniform(kb, (1, fan_out), jnp.float32, -bound, bound)
        return w, b

    w1, b1 = lin(ks[0], ks[1], dim_obs, HIDDEN)
    w3, b3 = lin(ks[2], ks[3], HIDDEN, HIDDEN)
    wo, bo = lin(ks[4], ks[5], HIDDEN, N_ACT)
    return {
        "w1": w1, "b1": b1,
        "gamma1": jnp.ones((1, HIDDEN), jnp.float32),
        "beta1": jnp.zeros((1, HIDDEN), jnp.float32),
        "w3": w3, "b3": b3,
        "gamma3": jnp.ones((1, HIDDEN), jnp.float32),
        "beta3": jnp.zeros((1, HIDDEN), jnp.float32),
        "wo": wo, "bo": bo,
    }


def prepare_params(p):
    """Kernel-layout params: bf16 weights, padded K / head, no fc biases.

    fc1/fc3 biases are dropped: training-mode BatchNorm subtracts the batch
    mean, which cancels a per-feature bias exactly.
    """
    dim_obs = p["w1"].shape[0]
    kp = ((dim_obs + 127) // 128) * 128
    w1 = jnp.zeros((kp, HIDDEN), jnp.float32).at[:dim_obs].set(p["w1"])
    wo = jnp.zeros((HIDDEN, OUT_PAD), jnp.float32).at[:, :N_ACT].set(p["wo"])
    bo = jnp.zeros((1, OUT_PAD), jnp.float32).at[:, :N_ACT].set(p["bo"])
    return {
        "w1": w1.astype(jnp.bfloat16),
        "gamma1": p["gamma1"], "beta1": p["beta1"],
        "w3": p["w3"].astype(jnp.bfloat16),
        "gamma3": p["gamma3"], "beta3": p["beta3"],
        "wo": wo.astype(jnp.bfloat16),
        "bo": bo,
    }


def _reference(x, p_raw, p_prep):
    """Original module forward (bias + two-pass BN) with the same bf16-rounded
    weights the kernel sees, so the check isolates kernel correctness."""
    d = x.shape[1]
    w1 = p_prep["w1"].astype(jnp.float32)[:d, :]
    w3 = p_prep["w3"].astype(jnp.float32)
    wo = p_prep["wo"].astype(jnp.float32)[:, :N_ACT]
    bo = p_prep["bo"][:, :N_ACT]

    def bn(h, gamma, beta):
        m = h.mean(0, keepdims=True)
        v = ((h - m) ** 2).mean(0, keepdims=True)      # biased, two-pass
        return (h - m) / jnp.sqrt(v + BN_EPS) * gamma + beta

    h = x @ w1 + p_raw["b1"]        # bias kept here; BN cancels it exactly
    h = jnp.maximum(bn(h, p_raw["gamma1"], p_raw["beta1"]), 0.0)
    h = h @ w3 + p_raw["b3"]
    h = jnp.maximum(bn(h, p_raw["gamma3"], p_raw["beta3"]), 0.0)
    return h @ wo + bo


if __name__ == "__main__":
    DIM_OBS = 64   # arguments.dim_obs (synthetic)
    BATCH = 8

    key = jax.random.PRNGKey(0)
    kx, kp = jax.random.split(key)
    x = jax.random.normal(kx, (BATCH, DIM_OBS), jnp.float32)
    raw = init_params(kp, DIM_OBS)
    params = prepare_params(raw)

    out = dqn_forward(x, params)
    out = jax.block_until_ready(out)
    assert out.shape == (BATCH, N_ACT), out.shape

    ref = _reference(x, raw, params)
    max_diff = jnp.max(jnp.abs(out - ref))
    assert jnp.allclose(out, ref, atol=5e-4, rtol=5e-4), \
        f"max abs diff {max_diff}"

    print("KERNEL_OK")
</pallas_src>

<mosaic_0001>
module attributes {stable_mosaic.version = 11 : i64} {
  func.func @_dqn_kernel(%arg0: memref<8x128xf32, #tpu.memory_space<vmem>>, %arg1: memref<128x512xbf16, #tpu.memory_space<vmem>>, %arg2: memref<1x512xf32, #tpu.memory_space<vmem>>, %arg3: memref<1x512xf32, #tpu.memory_space<vmem>>, %arg4: memref<512x512xbf16, #tpu.memory_space<vmem>>, %arg5: memref<1x512xf32, #tpu.memory_space<vmem>>, %arg6: memref<1x512xf32, #tpu.memory_space<vmem>>, %arg7: memref<512x128xbf16, #tpu.memory_space<vmem>>, %arg8: memref<1x128xf32, #tpu.memory_space<vmem>>, %arg9: memref<8x128xf32, #tpu.memory_space<vmem>>) attributes {dimension_semantics = [], scalar_prefetch = 0 : i64, scratch_operands = 0 : i64, tpu.core_type = #tpu.core_type<tc>} {
    %c0 = arith.constant 0 : index
    %c0_0 = arith.constant 0 : index
    %0 = vector.load %arg0[%c0, %c0_0] : memref<8x128xf32, #tpu.memory_space<vmem>>, vector<8x128xf32>
    %c0_1 = arith.constant 0 : index
    %c0_2 = arith.constant 0 : index
    %1 = vector.load %arg1[%c0_1, %c0_2] : memref<128x512xbf16, #tpu.memory_space<vmem>>, vector<128x512xbf16>
    %2 = arith.extf %1 : vector<128x512xbf16> to vector<128x512xf32>
    %cst = arith.constant dense<0.000000e+00> : vector<8x512xf32>
    %3 = tpu.matmul %0, %2, %cst {dimension_numbers = #tpu.dot_dimension_numbers<[1], [0], [0], [1], [0, 0, 1, 1], [], []>} : vector<8x128xf32>, vector<128x512xf32>, vector<8x512xf32> -> vector<8x512xf32>
    %c0_3 = arith.constant 0 : index
    %c0_4 = arith.constant 0 : index
    %4 = vector.load %arg2[%c0_3, %c0_4] : memref<1x512xf32, #tpu.memory_space<vmem>>, vector<1x512xf32>
    %c0_5 = arith.constant 0 : index
    %c0_6 = arith.constant 0 : index
    %5 = vector.load %arg3[%c0_5, %c0_6] : memref<1x512xf32, #tpu.memory_space<vmem>>, vector<1x512xf32>
    %cst_7 = arith.constant dense<0.000000e+00> : vector<512xf32>
    %6 = vector.multi_reduction <add>, %3, %cst_7 [0] : vector<8x512xf32> to vector<512xf32>
    %7 = vector.shape_cast %6 : vector<512xf32> to vector<1x512xf32>
    %cst_8 = arith.constant 1.250000e-01 : f32
    %8 = vector.broadcast %cst_8 : f32 to vector<1x512xf32>
    %9 = arith.mulf %7, %8 : vector<1x512xf32>
    %10 = arith.mulf %3, %3 : vector<8x512xf32>
    %cst_9 = arith.constant dense<0.000000e+00> : vector<512xf32>
    %11 = vector.multi_reduction <add>, %10, %cst_9 [0] : vector<8x512xf32> to vector<512xf32>
    %12 = vector.shape_cast %11 : vector<512xf32> to vector<1x512xf32>
    %cst_10 = arith.constant 1.250000e-01 : f32
    %13 = vector.broadcast %cst_10 : f32 to vector<1x512xf32>
    %14 = arith.mulf %12, %13 : vector<1x512xf32>
    %15 = arith.mulf %9, %9 : vector<1x512xf32>
    %16 = arith.subf %14, %15 : vector<1x512xf32>
    %cst_11 = arith.constant 0.000000e+00 : f32
    %17 = vector.broadcast %cst_11 : f32 to vector<1x512xf32>
    %18 = arith.maximumf %16, %17 : vector<1x512xf32>
    %cst_12 = arith.constant 9.99999974E-6 : f32
    %19 = vector.broadcast %cst_12 : f32 to vector<1x512xf32>
    %20 = arith.addf %18, %19 : vector<1x512xf32>
    %21 = math.rsqrt %20 : vector<1x512xf32>
    %22 = arith.mulf %4, %21 : vector<1x512xf32>
    %23 = arith.mulf %9, %22 : vector<1x512xf32>
    %24 = arith.subf %5, %23 : vector<1x512xf32>
    %25 = vector.broadcast %22 : vector<1x512xf32> to vector<8x512xf32>
    %26 = arith.mulf %3, %25 : vector<8x512xf32>
    %27 = vector.broadcast %24 : vector<1x512xf32> to vector<8x512xf32>
    %28 = arith.addf %26, %27 : vector<8x512xf32>
    %cst_13 = arith.constant 0.000000e+00 : f32
    %29 = vector.broadcast %cst_13 : f32 to vector<8x512xf32>
    %30 = arith.maximumf %28, %29 : vector<8x512xf32>
    %c0_14 = arith.constant 0 : index
    %c0_15 = arith.constant 0 : index
    %31 = vector.load %arg4[%c0_14, %c0_15] : memref<512x512xbf16, #tpu.memory_space<vmem>>, vector<512x512xbf16>
    %32 = arith.extf %31 : vector<512x512xbf16> to vector<512x512xf32>
    %cst_16 = arith.constant dense<0.000000e+00> : vector<8x512xf32>
    %33 = tpu.matmul %30, %32, %cst_16 {dimension_numbers = #tpu.dot_dimension_numbers<[1], [0], [0], [1], [0, 0, 1, 1], [], []>} : vector<8x512xf32>, vector<512x512xf32>, vector<8x512xf32> -> vector<8x512xf32>
    %c0_17 = arith.constant 0 : index
    %c0_18 = arith.constant 0 : index
    %34 = vector.load %arg5[%c0_17, %c0_18] : memref<1x512xf32, #tpu.memory_space<vmem>>, vector<1x512xf32>
    %c0_19 = arith.constant 0 : index
    %c0_20 = arith.constant 0 : index
    %35 = vector.load %arg6[%c0_19, %c0_20] : memref<1x512xf32, #tpu.memory_space<vmem>>, vector<1x512xf32>
    %cst_21 = arith.constant dense<0.000000e+00> : vector<512xf32>
    %36 = vector.multi_reduction <add>, %33, %cst_21 [0] : vector<8x512xf32> to vector<512xf32>
    %37 = vector.shape_cast %36 : vector<512xf32> to vector<1x512xf32>
    %cst_22 = arith.constant 1.250000e-01 : f32
    %38 = vector.broadcast %cst_22 : f32 to vector<1x512xf32>
    %39 = arith.mulf %37, %38 : vector<1x512xf32>
    %40 = arith.mulf %33, %33 : vector<8x512xf32>
    %cst_23 = arith.constant dense<0.000000e+00> : vector<512xf32>
    %41 = vector.multi_reduction <add>, %40, %cst_23 [0] : vector<8x512xf32> to vector<512xf32>
    %42 = vector.shape_cast %41 : vector<512xf32> to vector<1x512xf32>
    %cst_24 = arith.constant 1.250000e-01 : f32
    %43 = vector.broadcast %cst_24 : f32 to vector<1x512xf32>
    %44 = arith.mulf %42, %43 : vector<1x512xf32>
    %45 = arith.mulf %39, %39 : vector<1x512xf32>
    %46 = arith.subf %44, %45 : vector<1x512xf32>
    %cst_25 = arith.constant 0.000000e+00 : f32
    %47 = vector.broadcast %cst_25 : f32 to vector<1x512xf32>
    %48 = arith.maximumf %46, %47 : vector<1x512xf32>
    %cst_26 = arith.constant 9.99999974E-6 : f32
    %49 = vector.broadcast %cst_26 : f32 to vector<1x512xf32>
    %50 = arith.addf %48, %49 : vector<1x512xf32>
    %51 = math.rsqrt %50 : vector<1x512xf32>
    %52 = arith.mulf %34, %51 : vector<1x512xf32>
    %53 = arith.mulf %39, %52 : vector<1x512xf32>
    %54 = arith.subf %35, %53 : vector<1x512xf32>
    %55 = vector.broadcast %52 : vector<1x512xf32> to vector<8x512xf32>
    %56 = arith.mulf %33, %55 : vector<8x512xf32>
    %57 = vector.broadcast %54 : vector<1x512xf32> to vector<8x512xf32>
    %58 = arith.addf %56, %57 : vector<8x512xf32>
    %cst_27 = arith.constant 0.000000e+00 : f32
    %59 = vector.broadcast %cst_27 : f32 to vector<8x512xf32>
    %60 = arith.maximumf %58, %59 : vector<8x512xf32>
    %c0_28 = arith.constant 0 : index
    %c0_29 = arith.constant 0 : index
    %61 = vector.load %arg7[%c0_28, %c0_29] : memref<512x128xbf16, #tpu.memory_space<vmem>>, vector<512x128xbf16>
    %62 = arith.extf %61 : vector<512x128xbf16> to vector<512x128xf32>
    %cst_30 = arith.constant dense<0.000000e+00> : vector<8x128xf32>
    %63 = tpu.matmul %60, %62, %cst_30 {dimension_numbers = #tpu.dot_dimension_numbers<[1], [0], [0], [1], [0, 0, 1, 1], [], []>} : vector<8x512xf32>, vector<512x128xf32>, vector<8x128xf32> -> vector<8x128xf32>
    %c0_31 = arith.constant 0 : index
    %c0_32 = arith.constant 0 : index
    %64 = vector.load %arg8[%c0_31, %c0_32] : memref<1x128xf32, #tpu.memory_space<vmem>>, vector<1x128xf32>
    %65 = vector.broadcast %64 : vector<1x128xf32> to vector<8x128xf32>
    %66 = arith.addf %63, %65 : vector<8x128xf32>
    %c0_33 = arith.constant 0 : index
    %c0_34 = arith.constant 0 : index
    %67 = vector.load %arg9[%c0_33, %c0_34] : memref<8x128xf32, #tpu.memory_space<vmem>>, vector<8x128xf32>
    tpu.vector_store %arg9[%c0_33, %c0_34], %66 {strides = array<i32>} : memref<8x128xf32, #tpu.memory_space<vmem>>, vector<8x128xf32>,
    return
  }
}

</mosaic_0001>

<llo_original>
// kernel: dqn_forward.1
$region0: #{dqn_forward.1}
  #allocation0 [shape = 'u32[]', space=smem, size = 0x4, offset = 0x4, fixed_abs, tag = 'smem constant byte address 0x4 - core index']
  #allocation1 [shape = 'u32[144,128]{1,0:T(1,128)}', space=vmem, size = 0x12000, scoped, tag = 'internal scratch']
  %s0 = inlined_call_operand.vmem [shape: f32[8,128], index: 0, kind: input, shape index: {}]
  %s1 = inlined_call_operand.hbm [shape: bf16[128,512], index: 1, kind: input, shape index: {}]
  %s2 = inlined_call_operand.vmem [shape: f32[1,512], index: 2, kind: input, shape index: {}]
  %s3 = inlined_call_operand.vmem [shape: f32[1,512], index: 3, kind: input, shape index: {}]
  %s4 = inlined_call_operand.hbm [shape: bf16[512,512], index: 4, kind: input, shape index: {}]
  %s5 = inlined_call_operand.vmem [shape: f32[1,512], index: 5, kind: input, shape index: {}]
  %s6 = inlined_call_operand.vmem [shape: f32[1,512], index: 6, kind: input, shape index: {}]
  %s7 = inlined_call_operand.hbm [shape: bf16[512,128], index: 7, kind: input, shape index: {}]
  %s8 = inlined_call_operand.vmem [shape: f32[1,128], index: 8, kind: input, shape index: {}]
  %s9 = inlined_call_operand.hbm [shape: f32[8,128], index: 9, kind: output, shape index: {}]
  %s10 = sld [smem:[#allocation0]]
  $region58: #{dqn_forward.1} parent=0
    _
  %s12 = ssub.s32 1, %s10
  %s13 = scalar_select 0, %s12, %s10
  $region1: #{dqn_forward.1} parent=0
    #allocation2 [shape = 'u8[131072]{0}', space=vmem, size = 0x20000, scoped, tag = 'input window, operand 1, single buffered']
    #allocation3 [shape = 's32[1]{0}', space=sflag, size = 0x4, scoped, tag = 'scoped memory for dqn_forward.1']
    #allocation4 [shape = 's32[1]{0}', space=sflag, size = 0x4, scoped, tag = 'scoped memory for dqn_forward.1']
    #allocation5 [shape = 'u8[524288]{0}', space=vmem, size = 0x80000, scoped, tag = 'input window, operand 4, single buffered']
    #allocation6 [shape = 's32[1]{0}', space=sflag, size = 0x4, scoped, tag = 'scoped memory for dqn_forward.1']
    #allocation7 [shape = 'u8[131072]{0}', space=vmem, size = 0x20000, scoped, tag = 'input window, operand 7, single buffered']
    #allocation8 [shape = 'u8[4096]{0}', space=vmem, size = 0x1000, scoped, tag = 'output window, operand 0, single buffered']
    %14 = vsyncpa [#allocation3], 0
    %15 = vsyncpa [#allocation6], 0
    %16 = vsyncpa [#allocation4], 0
    // Predicated region
    $region2: #{dqn_forward.1} parent=1 // pred_check
      _
    $region3: #{dqn_forward.1} parent=1 // pred_check_branch
      %18 = sbr.rel (0) target = $region5
    $region4: #{dqn_forward.1} parent=1 // pred_region
      _
    $region5: #{dqn_forward.1} parent=1 // pred_fallthru
      _
    // Predicated region
    $region6: #{dqn_forward.1} parent=1 // pred_check
      _
    $region7: #{dqn_forward.1} parent=1 // pred_check_branch
      %20 = sbr.rel (0) target = $region9
    $region8: #{dqn_forward.1} parent=1 // pred_region
      %s22 = ssub.s32 4096, 4096
      %23 = vsyncadd [#allocation3], %s22
      %s24 = sshll.u32 [#allocation2], 4
      %s25 = int_to_ptr.vmem [resolvable:$true] %s24
      %30 = dma.hbm_to_vmem [thread:$0]  %s1, 4096, %s25, [#allocation3], 256, 256, 16
    $region9: #{dqn_forward.1} parent=1 // pred_fallthru
      _
    // Predicated region
    $region10: #{dqn_forward.1} parent=1 // pred_check
      _
    $region11: #{dqn_forward.1} parent=1 // pred_check_branch
      %32 = sbr.rel (0) target = $region13
    $region12: #{dqn_forward.1} parent=1 // pred_region
      _
    $region13: #{dqn_forward.1} parent=1 // pred_fallthru
      _
    // Predicated region
    $region14: #{dqn_forward.1} parent=1 // pred_check
      _
    $region15: #{dqn_forward.1} parent=1 // pred_check_branch
      %34 = sbr.rel (0) target = $region17
    $region16: #{dqn_forward.1} parent=1 // pred_region
      _
    $region17: #{dqn_forward.1} parent=1 // pred_fallthru
      _
    // Predicated region
    $region18: #{dqn_forward.1} parent=1 // pred_check
      _
    $region19: #{dqn_forward.1} parent=1 // pred_check_branch
      %36 = sbr.rel (0) target = $region21
    $region20: #{dqn_forward.1} parent=1 // pred_region
      %s38 = ssub.s32 16384, 16384
      %39 = vsyncadd [#allocation6], %s38
      %s40 = sshll.u32 [#allocation5], 4
      %s41 = int_to_ptr.vmem [resolvable:$true] %s40
      %46 = dma.hbm_to_vmem [thread:$0]  %s4, 16384, %s41, [#allocation6], 256, 256, 16
    $region21: #{dqn_forward.1} parent=1 // pred_fallthru
      _
    // Predicated region
    $region22: #{dqn_forward.1} parent=1 // pred_check
      _
    $region23: #{dqn_forward.1} parent=1 // pred_check_branch
      %48 = sbr.rel (0) target = $region25
    $region24: #{dqn_forward.1} parent=1 // pred_region
      _
    $region25: #{dqn_forward.1} parent=1 // pred_fallthru
      _
    // Predicated region
    $region26: #{dqn_forward.1} parent=1 // pred_check
      _
    $region27: #{dqn_forward.1} parent=1 // pred_check_branch
      %50 = sbr.rel (0) target = $region29
    $region28: #{dqn_forward.1} parent=1 // pred_region
      _
    $region29: #{dqn_forward.1} parent=1 // pred_fallthru
      _
    // Predicated region
    $region30: #{dqn_forward.1} parent=1 // pred_check
      _
    $region31: #{dqn_forward.1} parent=1 // pred_check_branch
      %52 = sbr.rel (0) target = $region33
    $region32: #{dqn_forward.1} parent=1 // pred_region
      %s54 = ssub.s32 4096, 4096
      %55 = vsyncadd [#allocation6], %s54
      %s56 = sshll.u32 [#allocation7], 4
      %s57 = int_to_ptr.vmem [resolvable:$true] %s56
      %62 = dma.hbm_to_vmem [thread:$0]  %s7, 4096, %s57, [#allocation6], 64, 64, 4
    $region33: #{dqn_forward.1} parent=1 // pred_fallthru
      _
    // Predicated region
    $region34: #{dqn_forward.1} parent=1 // pred_check
      _
    $region35: #{dqn_forward.1} parent=1 // pred_check_branch
      %64 = sbr.rel (0) target = $region37
    $region36: #{dqn_forward.1} parent=1 // pred_region
      _
    $region37: #{dqn_forward.1} parent=1 // pred_fallthru
      _
    // Predicated region
    $region38: #{dqn_forward.1} parent=1 // pred_check
      _
    $region39: #{dqn_forward.1} parent=1 // pred_check_branch
      %66 = sbr.rel (0) target = $region41
    $region40: #{dqn_forward.1} parent=1 // pred_region
      %67 = dma.done [#allocation3], 4096
    $region41: #{dqn_forward.1} parent=1 // pred_fallthru
      _
    // Predicated region
    $region42: #{dqn_forward.1} parent=1 // pred_check
      _
    $region43: #{dqn_forward.1} parent=1 // pred_check_branch
      %69 = sbr.rel (0) target = $region45
    $region44: #{dqn_forward.1} parent=1 // pred_region
      %70 = dma.done [#allocation6], 16384
    $region45: #{dqn_forward.1} parent=1 // pred_fallthru
      _
    // Predicated region
    $region46: #{dqn_forward.1} parent=1 // pred_check
      _
    $region47: #{dqn_forward.1} parent=1 // pred_check_branch
      %72 = sbr.rel (0) target = $region49
    $region48: #{dqn_forward.1} parent=1 // pred_region
      %73 = dma.done [#allocation6], 4096
    $region49: #{dqn_forward.1} parent=1 // pred_fallthru
      _
    %v74 = vld [vmem:[%s0] sm:$0xff]
    %v75 = vld [vmem:[#allocation2] sm:$0xff]
    %v76 = vld [vmem:[#allocation2 + $0x8] sm:$0xff]
    %v77 = vld [vmem:[#allocation2 + $0x10] sm:$0xff]
    %v78 = vld [vmem:[#allocation2 + $0x18] sm:$0xff]
    %v79 = vld [vmem:[#allocation2 + $0x20] sm:$0xff]
    %v80 = vld [vmem:[#allocation2 + $0x28] sm:$0xff]
    %v81 = vld [vmem:[#allocation2 + $0x30] sm:$0xff]
    %v82 = vld [vmem:[#allocation2 + $0x38] sm:$0xff]
    %v83 = vld [vmem:[#allocation2 + $0x40] sm:$0xff]
    %v84 = vld [vmem:[#allocation2 + $0x48] sm:$0xff]
    %v85 = vld [vmem:[#allocation2 + $0x50] sm:$0xff]
    %v86 = vld [vmem:[#allocation2 + $0x58] sm:$0xff]
    %v87 = vld [vmem:[#allocation2 + $0x60] sm:$0xff]
    %v88 = vld [vmem:[#allocation2 + $0x68] sm:$0xff]
    %v89 = vld [vmem:[#allocation2 + $0x70] sm:$0xff]
    %v90 = vld [vmem:[#allocation2 + $0x78] sm:$0xff]
    %v91 = vld [vmem:[#allocation2 + $0x80] sm:$0xff]
    %v92 = vld [vmem:[#allocation2 + $0x88] sm:$0xff]
    %v93 = vld [vmem:[#allocation2 + $0x90] sm:$0xff]
    %v94 = vld [vmem:[#allocation2 + $0x98] sm:$0xff]
    %v95 = vld [vmem:[#allocation2 + $0xa0] sm:$0xff]
    %v96 = vld [vmem:[#allocation2 + $0xa8] sm:$0xff]
    %v97 = vld [vmem:[#allocation2 + $0xb0] sm:$0xff]
    %v98 = vld [vmem:[#allocation2 + $0xb8] sm:$0xff]
    %v99 = vld [vmem:[#allocation2 + $0xc0] sm:$0xff]
    %v100 = vld [vmem:[#allocation2 + $0xc8] sm:$0xff]
    %v101 = vld [vmem:[#allocation2 + $0xd0] sm:$0xff]
    %v102 = vld [vmem:[#allocation2 + $0xd8] sm:$0xff]
    %v103 = vld [vmem:[#allocation2 + $0xe0] sm:$0xff]
    %v104 = vld [vmem:[#allocation2 + $0xe8] sm:$0xff]
    %v105 = vld [vmem:[#allocation2 + $0xf0] sm:$0xff]
    %v106 = vld [vmem:[#allocation2 + $0xf8] sm:$0xff]
    %v107 = vunpack.c.l.bf16 %v75
    %v108 = vunpack.c.h.bf16 %v75
    %v109 = vunpack.c.l.bf16 %v76
    %v110 = vunpack.c.h.bf16 %v76
    %v111 = vunpack.c.l.bf16 %v77
    %v112 = vunpack.c.h.bf16 %v77
    %v113 = vunpack.c.l.bf16 %v78
    %v114 = vunpack.c.h.bf16 %v78
    %v115 = vunpack.c.l.bf16 %v79
    %v116 = vunpack.c.h.bf16 %v79
    %v117 = vunpack.c.l.bf16 %v80
    %v118 = vunpack.c.h.bf16 %v80
    %v119 = vunpack.c.l.bf16 %v81
    %v120 = vunpack.c.h.bf16 %v81
    %v121 = vunpack.c.l.bf16 %v82
    %v122 = vunpack.c.h.bf16 %v82
    %v123 = vunpack.c.l.bf16 %v83
    %v124 = vunpack.c.h.bf16 %v83
    %v125 = vunpack.c.l.bf16 %v84
    %v126 = vunpack.c.h.bf16 %v84
    %v127 = vunpack.c.l.bf16 %v85
    %v128 = vunpack.c.h.bf16 %v85
    %v129 = vunpack.c.l.bf16 %v86
    %v130 = vunpack.c.h.bf16 %v86
    %v131 = vunpack.c.l.bf16 %v87
    %v132 = vunpack.c.h.bf16 %v87
    %v133 = vunpack.c.l.bf16 %v88
    %v134 = vunpack.c.h.bf16 %v88
    %v135 = vunpack.c.l.bf16 %v89
    %v136 = vunpack.c.h.bf16 %v89
    %v137 = vunpack.c.l.bf16 %v90
    %v138 = vunpack.c.h.bf16 %v90
    %v139 = vunpack.c.l.bf16 %v91
    %v140 = vunpack.c.h.bf16 %v91
    %v141 = vunpack.c.l.bf16 %v92
    %v142 = vunpack.c.h.bf16 %v92
    %v143 = vunpack.c.l.bf16 %v93
    %v144 = vunpack.c.h.bf16 %v93
    %v145 = vunpack.c.l.bf16 %v94
    %v146 = vunpack.c.h.bf16 %v94
    %v147 = vunpack.c.l.bf16 %v95
    %v148 = vunpack.c.h.bf16 %v95
    %v149 = vunpack.c.l.bf16 %v96
    %v150 = vunpack.c.h.bf16 %v96
    %v151 = vunpack.c.l.bf16 %v97
    %v152 = vunpack.c.h.bf16 %v97
    %v153 = vunpack.c.l.bf16 %v98
    %v154 = vunpack.c.h.bf16 %v98
    %v155 = vunpack.c.l.bf16 %v99
    %v156 = vunpack.c.h.bf16 %v99
    %v157 = vunpack.c.l.bf16 %v100
    %v158 = vunpack.c.h.bf16 %v100
    %v159 = vunpack.c.l.bf16 %v101
    %v160 = vunpack.c.h.bf16 %v101
    %v161 = vunpack.c.l.bf16 %v102
    %v162 = vunpack.c.h.bf16 %v102
    %v163 = vunpack.c.l.bf16 %v103
    %v164 = vunpack.c.h.bf16 %v103
    %v165 = vunpack.c.l.bf16 %v104
    %v166 = vunpack.c.h.bf16 %v104
    %v167 = vunpack.c.l.bf16 %v105
    %v168 = vunpack.c.h.bf16 %v105
    %v169 = vunpack.c.l.bf16 %v106
    %v170 = vunpack.c.h.bf16 %v106
    %171 = vmatprep.subr.mxu0 %v108
    %172 = vmatpush1.msra.mxu0 %v107
    %173 = vmatprep.subr.mxu0 %v112
    %174 = vmatpush1.msra.mxu0 %v111
    %175 = vmatprep.subr.mxu0 %v116
    %176 = vmatpush1.msra.mxu0 %v115
    %177 = vmatprep.subr.mxu0 %v120
    %178 = vmatpush1.msra.mxu0 %v119
    %179 = vmatprep.subr.mxu0 %v124
    %180 = vmatpush1.msra.mxu0 %v123
    %181 = vmatprep.subr.mxu0 %v128
    %182 = vmatpush1.msra.mxu0 %v127
    %183 = vmatprep.subr.mxu0 %v132
    %184 = vmatpush1.msra.mxu0 %v131
    %185 = vmatprep.subr.mxu0 %v136
    %186 = vmatpush1.msra.mxu0 %v135
    %187 = vmatprep.subr.mxu0 %v140
    %188 = vmatpush1.msra.mxu0 %v139
    %189 = vmatprep.subr.mxu0 %v144
    %190 = vmatpush1.msra.mxu0 %v143
    %191 = vmatprep.subr.mxu0 %v148
    %192 = vmatpush1.msra.mxu0 %v147
    %193 = vmatprep.subr.mxu0 %v152
    %194 = vmatpush1.msra.mxu0 %v151
    %195 = vmatprep.subr.mxu0 %v156
    %196 = vmatpush1.msra.mxu0 %v155
    %197 = vmatprep.subr.mxu0 %v160
    %198 = vmatpush1.msra.mxu0 %v159
    %199 = vmatprep.subr.mxu0 %v164
    %200 = vmatpush1.msra.mxu0 %v163
    %201 = vmatprep.subr.mxu0 %v168
    %202 = vmatpush1.msra.mxu0 %v167
    %203 = vmatprep.subr.mxu0 0.0
    %204 = vmatpush1.msra.mxu0 0.0
    %205 = vmatprep.subr.mxu0 0.0
    %206 = vmatpush1.msra.mxu0 0.0
    %207 = vmatprep.subr.mxu0 0.0
    %208 = vmatpush1.msra.mxu0 0.0
    %209 = vmatprep.subr.mxu0 0.0
    %210 = vmatpush1.msra.mxu0 0.0
    %211 = vmatprep.subr.mxu0 0.0
    %212 = vmatpush1.msra.mxu0 0.0
    %213 = vmatprep.subr.mxu0 0.0
    %214 = vmatpush1.msra.mxu0 0.0
    %215 = vmatprep.subr.mxu0 0.0
    %216 = vmatpush1.msra.mxu0 0.0
    %217 = vmatprep.subr.mxu0 0.0
    %218 = vmatpush1.msra.mxu0 0.0
    %219 = vmatprep.subr.mxu0 0.0
    %220 = vmatpush1.msra.mxu0 0.0
    %221 = vmatprep.subr.mxu0 0.0
    %222 = vmatpush1.msra.mxu0 0.0
    %223 = vmatprep.subr.mxu0 0.0
    %224 = vmatpush1.msra.mxu0 0.0
    %225 = vmatprep.subr.mxu0 0.0
    %226 = vmatpush1.msra.mxu0 0.0
    %227 = vmatprep.subr.mxu0 0.0
    %228 = vmatpush1.msra.mxu0 0.0
    %229 = vmatprep.subr.mxu0 0.0
    %230 = vmatpush1.msra.mxu0 0.0
    %231 = vmatprep.subr.mxu0 0.0
    %232 = vmatpush1.msra.mxu0 0.0
    %233 = vmatprep.subr.mxu0 0.0
    %234 = vmatpush1.msra.mxu0 0.0
    %235 = vmatprep.mubr.f32.mxu0 0.0
    %236 = vmatmul.mubr.f32.gmra.mrb[0].mxu0 %v74
    %v237 = vpop.f32.mrb[0].mxu0
    %v238 = vadd.f32 0.0, %v237
    %v239 = vpop.f32.mrb[0].mxu0
    %v240 = vadd.f32 0.0, %v239
    %241 = vdwg.mxu0
    %242 = vmatprep.subr.mxu0 %v110
    %243 = vmatpush1.msra.mxu0 %v109
    %244 = vmatprep.subr.mxu0 %v114
    %245 = vmatpush1.msra.mxu0 %v113
    %246 = vmatprep.subr.mxu0 %v118
    %247 = vmatpush1.msra.mxu0 %v117
    %248 = vmatprep.subr.mxu0 %v122
    %249 = vmatpush1.msra.mxu0 %v121
    %250 = vmatprep.subr.mxu0 %v126
    %251 = vmatpush1.msra.mxu0 %v125
    %252 = vmatprep.subr.mxu0 %v130
    %253 = vmatpush1.msra.mxu0 %v129
    %254 = vmatprep.subr.mxu0 %v134
    %255 = vmatpush1.msra.mxu0 %v133
    %256 = vmatprep.subr.mxu0 %v138
    %257 = vmatpush1.msra.mxu0 %v137
    %258 = vmatprep.subr.mxu0 %v142
    %259 = vmatpush1.msra.mxu0 %v141
    %260 = vmatprep.subr.mxu0 %v146
    %261 = vmatpush1.msra.mxu0 %v145
    %262 = vmatprep.subr.mxu0 %v150
    %263 = vmatpush1.msra.mxu0 %v149
    %264 = vmatprep.subr.mxu0 %v154
    %265 = vmatpush1.msra.mxu0 %v153
    %266 = vmatprep.subr.mxu0 %v158
    %267 = vmatpush1.msra.mxu0 %v157
    %268 = vmatprep.subr.mxu0 %v162
    %269 = vmatpush1.msra.mxu0 %v161
    %270 = vmatprep.subr.mxu0 %v166
    %271 = vmatpush1.msra.mxu0 %v165
    %272 = vmatprep.subr.mxu0 %v170
    %273 = vmatpush1.msra.mxu0 %v169
    %274 = vmatprep.subr.mxu0 0.0
    %275 = vmatpush1.msra.mxu0 0.0
    %276 = vmatprep.subr.mxu0 0.0
    %277 = vmatpush1.msra.mxu0 0.0
    %278 = vmatprep.subr.mxu0 0.0
    %279 = vmatpush1.msra.mxu0 0.0
    %280 = vmatprep.subr.mxu0 0.0
    %281 = vmatpush1.msra.mxu0 0.0
    %282 = vmatprep.subr.mxu0 0.0
    %283 = vmatpush1.msra.mxu0 0.0
    %284 = vmatprep.subr.mxu0 0.0
    %285 = vmatpush1.msra.mxu0 0.0
    %286 = vmatprep.subr.mxu0 0.0
    %287 = vmatpush1.msra.mxu0 0.0
    %288 = vmatprep.subr.mxu0 0.0
    %289 = vmatpush1.msra.mxu0 0.0
    %290 = vmatprep.subr.mxu0 0.0
    %291 = vmatpush1.msra.mxu0 0.0
    %292 = vmatprep.subr.mxu0 0.0
    %293 = vmatpush1.msra.mxu0 0.0
    %294 = vmatprep.subr.mxu0 0.0
    %295 = vmatpush1.msra.mxu0 0.0
    %296 = vmatprep.subr.mxu0 0.0
    %297 = vmatpush1.msra.mxu0 0.0
    %298 = vmatprep.subr.mxu0 0.0
    %299 = vmatpush1.msra.mxu0 0.0
    %300 = vmatprep.subr.mxu0 0.0
    %301 = vmatpush1.msra.mxu0 0.0
    %302 = vmatprep.subr.mxu0 0.0
    %303 = vmatpush1.msra.mxu0 0.0
    %304 = vmatprep.subr.mxu0 0.0
    %305 = vmatpush1.msra.mxu0 0.0
    %306 = vmatprep.mubr.f32.mxu0 0.0
    %307 = vmatmul.mubr.f32.gmra.mrb[0].mxu0 %v74
    %v308 = vpop.f32.mrb[0].mxu0
    %v309 = vadd.f32 0.0, %v308
    %v310 = vpop.f32.mrb[0].mxu0
    %v311 = vadd.f32 0.0, %v310
    %312 = vdwg.mxu0
    %v313 = vld [vmem:[%s2] sm:$0xf]
    %v314 = vld [vmem:[%s3] sm:$0xf]
    %v315 = vrot.slane %v238, 4
    %v316 = vadd.f32 %v238, %v315
    %v317 = vrot.slane %v316, 2
    %v318 = vadd.f32 %v316, %v317
    %v319 = vrot.slane %v318, 1
    %v320 = vadd.f32 %v318, %v319
    %v321 = vrot.slane %v240, 4
    %v322 = vadd.f32 %v240, %v321
    %v323 = vrot.slane %v322, 2
    %v324 = vadd.f32 %v322, %v323
    %v325 = vrot.slane %v324, 1
    %v326 = vadd.f32 %v324, %v325
    %v327 = vrot.slane %v309, 4
    %v328 = vadd.f32 %v309, %v327
    %v329 = vrot.slane %v328, 2
    %v330 = vadd.f32 %v328, %v329
    %v331 = vrot.slane %v330, 1
    %v332 = vadd.f32 %v330, %v331
    %v333 = vrot.slane %v311, 4
    %v334 = vadd.f32 %v311, %v333
    %v335 = vrot.slane %v334, 2
    %v336 = vadd.f32 %v334, %v335
    %v337 = vrot.slane %v336, 1
    %v338 = vadd.f32 %v336, %v337
    %v339 = vmul.f32 %v320, 0.125
    %v340 = vmul.f32 %v326, 0.125
    %v341 = vmul.f32 %v332, 0.125
    %v342 = vmul.f32 %v338, 0.125
    %v343 = vmul.f32 %v238, %v238
    %v344 = vmul.f32 %v240, %v240
    %v345 = vmul.f32 %v309, %v309
    %v346 = vmul.f32 %v311, %v311
    %v347 = vrot.slane %v343, 4
    %v348 = vadd.f32 %v343, %v347
    %v349 = vrot.slane %v348, 2
    %v350 = vadd.f32 %v348, %v349
    %v351 = vrot.slane %v350, 1
    %v352 = vadd.f32 %v350, %v351
    %v353 = vrot.slane %v344, 4
    %v354 = vadd.f32 %v344, %v353
    %v355 = vrot.slane %v354, 2
    %v356 = vadd.f32 %v354, %v355
    %v357 = vrot.slane %v356, 1
    %v358 = vadd.f32 %v356, %v357
    %v359 = vrot.slane %v345, 4
    %v360 = vadd.f32 %v345, %v359
    %v361 = vrot.slane %v360, 2
    %v362 = vadd.f32 %v360, %v361
    %v363 = vrot.slane %v362, 1
    %v364 = vadd.f32 %v362, %v363
    %v365 = vrot.slane %v346, 4
    %v366 = vadd.f32 %v346, %v365
    %v367 = vrot.slane %v366, 2
    %v368 = vadd.f32 %v366, %v367
    %v369 = vrot.slane %v368, 1
    %v370 = vadd.f32 %v368, %v369
    %v371 = vmul.f32 %v352, 0.125
    %v372 = vmul.f32 %v358, 0.125
    %v373 = vmul.f32 %v364, 0.125
    %v374 = vmul.f32 %v370, 0.125
    %v375 = vmul.f32 %v339, %v339
    %v376 = vmul.f32 %v340, %v340
    %v377 = vmul.f32 %v341, %v341
    %v378 = vmul.f32 %v342, %v342
    %v379 = vsub.f32 %v371, %v375
    %v380 = vsub.f32 %v372, %v376
    %v381 = vsub.f32 %v373, %v377
    %v382 = vsub.f32 %v374, %v378
    %v383 = vmax.f32 %v379, 0.0
    %v384 = vmax.f32 %v380, 0.0
    %v385 = vmax.f32 %v381, 0.0
    %v386 = vmax.f32 %v382, 0.0
    %v387 = vadd.f32 %v383, 1e-05
    %v388 = vadd.f32 %v384, 1e-05
    %v389 = vadd.f32 %v385, 1e-05
    %v390 = vadd.f32 %v386, 1e-05
    %v391 = vrsqrt.pop %v387
    %v392 = vrsqrt.pop %v388
    %v393 = vrsqrt.pop %v389
    %v394 = vrsqrt.pop %v390
    %v399 = vcombine.low %v391, %v392
    %v400 = vcombine.low %v393, %v394
    %v402 = vunpack.c.l.s4 1966171168
    %v403 = vunpack.c.0.s8 %v402
    %v404 = vlaneseq
    %v405 = vshrl.u32 %v404, 7
    %v406 = vsub.s32 %v403, %v405
    %v407 = vrot.slane %v399, %v406
    %v409 = vunpack.c.l.s4 1966171168
    %v410 = vunpack.c.0.s8 %v409
    %v411 = vlaneseq
    %v412 = vshrl.u32 %v411, 7
    %v413 = vsub.s32 %v410, %v412
    %v414 = vrot.slane %v400, %v413
    %v415 = vcombine.low %v407, %v414
    %v417 = vunpack.c.l.s4 1966171168
    %v418 = vunpack.c.0.s8 %v417
    %v419 = vlaneseq
    %v420 = vshrl.u32 %v419, 7
    %v421 = vsub.s32 %v418, %v420
    %v422 = vrot.slane %v415, %v421
    %v424 = vmul.f32 %v313, %v422
    %v426 = vlaneseq
    %v427 = vshrl.u32 %v426, 7
    %v428 = vsub.s32 0, %v427
    %v429 = vrot.slane %v424, %v428
    %v430 = vlaneseq
    %v431 = vshrl.u32 %v430, 7
    %v432 = vsub.s32 1, %v431
    %v433 = vrot.slane %v424, %v432
    %v434 = vlaneseq
    %v435 = vshrl.u32 %v434, 7
    %v436 = vsub.s32 2, %v435
    %v437 = vrot.slane %v424, %v436
    %v438 = vlaneseq
    %v439 = vshrl.u32 %v438, 7
    %v440 = vsub.s32 3, %v439
    %v441 = vrot.slane %v424, %v440
    %v446 = vmul.f32 %v339, %v429
    %v447 = vmul.f32 %v340, %v433
    %v448 = vmul.f32 %v341, %v437
    %v449 = vmul.f32 %v342, %v441
    %v454 = vcombine.low %v446, %v447
    %v455 = vcombine.low %v448, %v449
    %v457 = vunpack.c.l.s4 1966171168
    %v458 = vunpack.c.0.s8 %v457
    %v459 = vlaneseq
    %v460 = vshrl.u32 %v459, 7
    %v461 = vsub.s32 %v458, %v460
    %v462 = vrot.slane %v454, %v461
    %v464 = vunpack.c.l.s4 1966171168
    %v465 = vunpack.c.0.s8 %v464
    %v466 = vlaneseq
    %v467 = vshrl.u32 %v466, 7
    %v468 = vsub.s32 %v465, %v467
    %v469 = vrot.slane %v455, %v468
    %v470 = vcombine.low %v462, %v469
    %v472 = vunpack.c.l.s4 1966171168
    %v473 = vunpack.c.0.s8 %v472
    %v474 = vlaneseq
    %v475 = vshrl.u32 %v474, 7
    %v476 = vsub.s32 %v473, %v475
    %v477 = vrot.slane %v470, %v476
    %v479 = vsub.f32 %v314, %v477
    %v480 = vmul.f32 %v238, %v429
    %v481 = vmul.f32 %v240, %v433
    %v482 = vmul.f32 %v309, %v437
    %v483 = vmul.f32 %v311, %v441
    %v485 = vlaneseq
    %v486 = vshrl.u32 %v485, 7
    %v487 = vsub.s32 0, %v486
    %v488 = vrot.slane %v479, %v487
    %v489 = vlaneseq
    %v490 = vshrl.u32 %v489, 7
    %v491 = vsub.s32 1, %v490
    %v492 = vrot.slane %v479, %v491
    %v493 = vlaneseq
    %v494 = vshrl.u32 %v493, 7
    %v495 = vsub.s32 2, %v494
    %v496 = vrot.slane %v479, %v495
    %v497 = vlaneseq
    %v498 = vshrl.u32 %v497, 7
    %v499 = vsub.s32 3, %v498
    %v500 = vrot.slane %v479, %v499
    %v505 = vadd.f32 %v480, %v488
    %v506 = vadd.f32 %v481, %v492
    %v507 = vadd.f32 %v482, %v496
    %v508 = vadd.f32 %v483, %v500
    %v509 = vmax.f32 %v505, 0.0
    %v510 = vmax.f32 %v506, 0.0
    %v511 = vmax.f32 %v507, 0.0
    %v512 = vmax.f32 %v508, 0.0
    %v513 = vld [vmem:[#allocation5] sm:$0xff]
    %v514 = vld [vmem:[#allocation5 + $0x8] sm:$0xff]
    %v515 = vld [vmem:[#allocation5 + $0x10] sm:$0xff]
    %v516 = vld [vmem:[#allocation5 + $0x18] sm:$0xff]
    %v517 = vld [vmem:[#allocation5 + $0x20] sm:$0xff]
    %v518 = vld [vmem:[#allocation5 + $0x28] sm:$0xff]
    %v519 = vld [vmem:[#allocation5 + $0x30] sm:$0xff]
    %v520 = vld [vmem:[#allocation5 + $0x38] sm:$0xff]
    %v521 = vld [vmem:[#allocation5 + $0x40] sm:$0xff]
    %v522 = vld [vmem:[#allocation5 + $0x48] sm:$0xff]
    %v523 = vld [vmem:[#allocation5 + $0x50] sm:$0xff]
    %v524 = vld [vmem:[#allocation5 + $0x58] sm:$0xff]
    %v525 = vld [vmem:[#allocation5 + $0x60] sm:$0xff]
    %v526 = vld [vmem:[#allocation5 + $0x68] sm:$0xff]
    %v527 = vld [vmem:[#allocation5 + $0x70] sm:$0xff]
    %v528 = vld [vmem:[#allocation5 + $0x78] sm:$0xff]
    %v529 = vld [vmem:[#allocation5 + $0x80] sm:$0xff]
    %v530 = vld [vmem:[#allocation5 + $0x88] sm:$0xff]
    %v531 = vld [vmem:[#allocation5 + $0x90] sm:$0xff]
    %v532 = vld [vmem:[#allocation5 + $0x98] sm:$0xff]
    %v533 = vld [vmem:[#allocation5 + $0xa0] sm:$0xff]
    %v534 = vld [vmem:[#allocation5 + $0xa8] sm:$0xff]
    %v535 = vld [vmem:[#allocation5 + $0xb0] sm:$0xff]
    %v536 = vld [vmem:[#allocation5 + $0xb8] sm:$0xff]
    %v537 = vld [vmem:[#allocation5 + $0xc0] sm:$0xff]
    %v538 = vld [vmem:[#allocation5 + $0xc8] sm:$0xff]
    %v539 = vld [vmem:[#allocation5 + $0xd0] sm:$0xff]
    %v540 = vld [vmem:[#allocation5 + $0xd8] sm:$0xff]
    %v541 = vld [vmem:[#allocation5 + $0xe0] sm:$0xff]
    %v542 = vld [vmem:[#allocation5 + $0xe8] sm:$0xff]
    %v543 = vld [vmem:[#allocation5 + $0xf0] sm:$0xff]
    %v544 = vld [vmem:[#allocation5 + $0xf8] sm:$0xff]
    %v545 = vld [vmem:[#allocation5 + $0x100] sm:$0xff]
    %v546 = vld [vmem:[#allocation5 + $0x108] sm:$0xff]
    %v547 = vld [vmem:[#allocation5 + $0x110] sm:$0xff]
    %v548 = vld [vmem:[#allocation5 + $0x118] sm:$0xff]
    %v549 = vld [vmem:[#allocation5 + $0x120] sm:$0xff]
    %v550 = vld [vmem:[#allocation5 + $0x128] sm:$0xff]
    %v551 = vld [vmem:[#allocation5 + $0x130] sm:$0xff]
    %v552 = vld [vmem:[#allocation5 + $0x138] sm:$0xff]
    %v553 = vld [vmem:[#allocation5 + $0x140] sm:$0xff]
    %v554 = vld [vmem:[#allocation5 + $0x148] sm:$0xff]
    %v555 = vld [vmem:[#allocation5 + $0x150] sm:$0xff]
    %v556 = vld [vmem:[#allocation5 + $0x158] sm:$0xff]
    %v557 = vld [vmem:[#allocation5 + $0x160] sm:$0xff]
    %v558 = vld [vmem:[#allocation5 + $0x168] sm:$0xff]
    %v559 = vld [vmem:[#allocation5 + $0x170] sm:$0xff]
    %v560 = vld [vmem:[#allocation5 + $0x178] sm:$0xff]
    %v561 = vld [vmem:[#allocation5 + $0x180] sm:$0xff]
    %v562 = vld [vmem:[#allocation5 + $0x188] sm:$0xff]
    %v563 = vld [vmem:[#allocation5 + $0x190] sm:$0xff]
    %v564 = vld [vmem:[#allocation5 + $0x198] sm:$0xff]
    %v565 = vld [vmem:[#allocation5 + $0x1a0] sm:$0xff]
    %v566 = vld [vmem:[#allocation5 + $0x1a8] sm:$0xff]
    %v567 = vld [vmem:[#allocation5 + $0x1b0] sm:$0xff]
    %v568 = vld [vmem:[#allocation5 + $0x1b8] sm:$0xff]
    %v569 = vld [vmem:[#allocation5 + $0x1c0] sm:$0xff]
    %v570 = vld [vmem:[#allocation5 + $0x1c8] sm:$0xff]
    %v571 = vld [vmem:[#allocation5 + $0x1d0] sm:$0xff]
    %v572 = vld [vmem:[#allocation5 + $0x1d8] sm:$0xff]
    %v573 = vld [vmem:[#allocation5 + $0x1e0] sm:$0xff]
    %v574 = vld [vmem:[#allocation5 + $0x1e8] sm:$0xff]
    %v575 = vld [vmem:[#allocation5 + $0x1f0] sm:$0xff]
    %v576 = vld [vmem:[#allocation5 + $0x1f8] sm:$0xff]
    %v577 = vld [vmem:[#allocation5 + $0x200] sm:$0xff]
    %v578 = vld [vmem:[#allocation5 + $0x208] sm:$0xff]
    %v579 = vld [vmem:[#allocation5 + $0x210] sm:$0xff]
    %v580 = vld [vmem:[#allocation5 + $0x218] sm:$0xff]
    %v581 = vld [vmem:[#allocation5 + $0x220] sm:$0xff]
    %v582 = vld [vmem:[#allocation5 + $0x228] sm:$0xff]
    %v583 = vld [vmem:[#allocation5 + $0x230] sm:$0xff]
    %v584 = vld [vmem:[#allocation5 + $0x238] sm:$0xff]
    %v585 = vld [vmem:[#allocation5 + $0x240] sm:$0xff]
    %v586 = vld [vmem:[#allocation5 + $0x248] sm:$0xff]
    %v587 = vld [vmem:[#allocation5 + $0x250] sm:$0xff]
    %v588 = vld [vmem:[#allocation5 + $0x258] sm:$0xff]
    %v589 = vld [vmem:[#allocation5 + $0x260] sm:$0xff]
    %v590 = vld [vmem:[#allocation5 + $0x268] sm:$0xff]
    %v591 = vld [vmem:[#allocation5 + $0x270] sm:$0xff]
    %v592 = vld [vmem:[#allocation5 + $0x278] sm:$0xff]
    %v593 = vld [vmem:[#allocation5 + $0x280] sm:$0xff]
    %v594 = vld [vmem:[#allocation5 + $0x288] sm:$0xff]
    %v595 = vld [vmem:[#allocation5 + $0x290] sm:$0xff]
    %v596 = vld [vmem:[#allocation5 + $0x298] sm:$0xff]
    %v597 = vld [vmem:[#allocation5 + $0x2a0] sm:$0xff]
    %v598 = vld [vmem:[#allocation5 + $0x2a8] sm:$0xff]
    %v599 = vld [vmem:[#allocation5 + $0x2b0] sm:$0xff]
    %v600 = vld [vmem:[#allocation5 + $0x2b8] sm:$0xff]
    %v601 = vld [vmem:[#allocation5 + $0x2c0] sm:$0xff]
    %v602 = vld [vmem:[#allocation5 + $0x2c8] sm:$0xff]
    %v603 = vld [vmem:[#allocation5 + $0x2d0] sm:$0xff]
    %v604 = vld [vmem:[#allocation5 + $0x2d8] sm:$0xff]
    %v605 = vld [vmem:[#allocation5 + $0x2e0] sm:$0xff]
    %v606 = vld [vmem:[#allocation5 + $0x2e8] sm:$0xff]
    %v607 = vld [vmem:[#allocation5 + $0x2f0] sm:$0xff]
    %v608 = vld [vmem:[#allocation5 + $0x2f8] sm:$0xff]
    %v609 = vld [vmem:[#allocation5 + $0x300] sm:$0xff]
    %v610 = vld [vmem:[#allocation5 + $0x308] sm:$0xff]
    %v611 = vld [vmem:[#allocation5 + $0x310] sm:$0xff]
    %v612 = vld [vmem:[#allocation5 + $0x318] sm:$0xff]
    %v613 = vld [vmem:[#allocation5 + $0x320] sm:$0xff]
    %v614 = vld [vmem:[#allocation5 + $0x328] sm:$0xff]
    %v615 = vld [vmem:[#allocation5 + $0x330] sm:$0xff]
    %v616 = vld [vmem:[#allocation5 + $0x338] sm:$0xff]
    %v617 = vld [vmem:[#allocation5 + $0x340] sm:$0xff]
    %v618 = vld [vmem:[#allocation5 + $0x348] sm:$0xff]
    %v619 = vld [vmem:[#allocation5 + $0x350] sm:$0xff]
    %v620 = vld [vmem:[#allocation5 + $0x358] sm:$0xff]
    %v621 = vld [vmem:[#allocation5 + $0x360] sm:$0xff]
    %v622 = vld [vmem:[#allocation5 + $0x368] sm:$0xff]
    %v623 = vld [vmem:[#allocation5 + $0x370] sm:$0xff]
    %v624 = vld [vmem:[#allocation5 + $0x378] sm:$0xff]
    %v625 = vld [vmem:[#allocation5 + $0x380] sm:$0xff]
    %v626 = vld [vmem:[#allocation5 + $0x388] sm:$0xff]
    %v627 = vld [vmem:[#allocation5 + $0x390] sm:$0xff]
    %v628 = vld [vmem:[#allocation5 + $0x398] sm:$0xff]
    %v629 = vld [vmem:[#allocation5 + $0x3a0] sm:$0xff]
    %v630 = vld [vmem:[#allocation5 + $0x3a8] sm:$0xff]
    %v631 = vld [vmem:[#allocation5 + $0x3b0] sm:$0xff]
    %v632 = vld [vmem:[#allocation5 + $0x3b8] sm:$0xff]
    %v633 = vld [vmem:[#allocation5 + $0x3c0] sm:$0xff]
    %v634 = vld [vmem:[#allocation5 + $0x3c8] sm:$0xff]
    %v635 = vld [vmem:[#allocation5 + $0x3d0] sm:$0xff]
    %v636 = vld [vmem:[#allocation5 + $0x3d8] sm:$0xff]
    %v637 = vld [vmem:[#allocation5 + $0x3e0] sm:$0xff]
    %v638 = vld [vmem:[#allocation5 + $0x3e8] sm:$0xff]
    %v639 = vld [vmem:[#allocation5 + $0x3f0] sm:$0xff]
    %v640 = vld [vmem:[#allocation5 + $0x3f8] sm:$0xff]
    %v641 = vunpack.c.l.bf16 %v513
    %v642 = vunpack.c.h.bf16 %v513
    %v643 = vunpack.c.l.bf16 %v514
    %v644 = vunpack.c.h.bf16 %v514
    %v645 = vunpack.c.l.bf16 %v515
    %v646 = vunpack.c.h.bf16 %v515
    %v647 = vunpack.c.l.bf16 %v516
    %v648 = vunpack.c.h.bf16 %v516
    %v649 = vunpack.c.l.bf16 %v517
    %v650 = vunpack.c.h.bf16 %v517
    %v651 = vunpack.c.l.bf16 %v518
    %v652 = vunpack.c.h.bf16 %v518
    %v653 = vunpack.c.l.bf16 %v519
    %v654 = vunpack.c.h.bf16 %v519
    %v655 = vunpack.c.l.bf16 %v520
    %v656 = vunpack.c.h.bf16 %v520
    %v657 = vunpack.c.l.bf16 %v521
    %v658 = vunpack.c.h.bf16 %v521
    %v659 = vunpack.c.l.bf16 %v522
    %v660 = vunpack.c.h.bf16 %v522
    %v661 = vunpack.c.l.bf16 %v523
    %v662 = vunpack.c.h.bf16 %v523
    %v663 = vunpack.c.l.bf16 %v524
    %v664 = vunpack.c.h.bf16 %v524
    %v665 = vunpack.c.l.bf16 %v525
    %v666 = vunpack.c.h.bf16 %v525
    %v667 = vunpack.c.l.bf16 %v526
    %v668 = vunpack.c.h.bf16 %v526
    %v669 = vunpack.c.l.bf16 %v527
    %v670 = vunpack.c.h.bf16 %v527
    %v671 = vunpack.c.l.bf16 %v528
    %v672 = vunpack.c.h.bf16 %v528
    %v673 = vunpack.c.l.bf16 %v529
    %v674 = vunpack.c.h.bf16 %v529
    %v675 = vunpack.c.l.bf16 %v530
    %v676 = vunpack.c.h.bf16 %v530
    %v677 = vunpack.c.l.bf16 %v531
    %v678 = vunpack.c.h.bf16 %v531
    %v679 = vunpack.c.l.bf16 %v532
    %v680 = vunpack.c.h.bf16 %v532
    %v681 = vunpack.c.l.bf16 %v533
    %v682 = vunpack.c.h.bf16 %v533
    %v683 = vunpack.c.l.bf16 %v534
    %v684 = vunpack.c.h.bf16 %v534
    %v685 = vunpack.c.l.bf16 %v535
    %v686 = vunpack.c.h.bf16 %v535
    %v687 = vunpack.c.l.bf16 %v536
    %v688 = vunpack.c.h.bf16 %v536
    %v689 = vunpack.c.l.bf16 %v537
    %v690 = vunpack.c.h.bf16 %v537
    %v691 = vunpack.c.l.bf16 %v538
    %v692 = vunpack.c.h.bf16 %v538
    %v693 = vunpack.c.l.bf16 %v539
    %v694 = vunpack.c.h.bf16 %v539
    %v695 = vunpack.c.l.bf16 %v540
    %v696 = vunpack.c.h.bf16 %v540
    %v697 = vunpack.c.l.bf16 %v541
    %v698 = vunpack.c.h.bf16 %v541
    %v699 = vunpack.c.l.bf16 %v542
    %v700 = vunpack.c.h.bf16 %v542
    %v701 = vunpack.c.l.bf16 %v543
    %v702 = vunpack.c.h.bf16 %v543
    %v703 = vunpack.c.l.bf16 %v544
    %v704 = vunpack.c.h.bf16 %v544
    %v705 = vunpack.c.l.bf16 %v545
    %v706 = vunpack.c.h.bf16 %v545
    %v707 = vunpack.c.l.bf16 %v546
    %v708 = vunpack.c.h.bf16 %v546
    %v709 = vunpack.c.l.bf16 %v547
    %v710 = vunpack.c.h.bf16 %v547
    %v711 = vunpack.c.l.bf16 %v548
    %v712 = vunpack.c.h.bf16 %v548
    %v713 = vunpack.c.l.bf16 %v549
    %v714 = vunpack.c.h.bf16 %v549
    %v715 = vunpack.c.l.bf16 %v550
    %v716 = vunpack.c.h.bf16 %v550
    %v717 = vunpack.c.l.bf16 %v551
    %v718 = vunpack.c.h.bf16 %v551
    %v719 = vunpack.c.l.bf16 %v552
    %v720 = vunpack.c.h.bf16 %v552
    %v721 = vunpack.c.l.bf16 %v553
    %v722 = vunpack.c.h.bf16 %v553
    %v723 = vunpack.c.l.bf16 %v554
    %v724 = vunpack.c.h.bf16 %v554
    %v725 = vunpack.c.l.bf16 %v555
    %v726 = vunpack.c.h.bf16 %v555
    %v727 = vunpack.c.l.bf16 %v556
    %v728 = vunpack.c.h.bf16 %v556
    %v729 = vunpack.c.l.bf16 %v557
    %v730 = vunpack.c.h.bf16 %v557
    %v731 = vunpack.c.l.bf16 %v558
    %v732 = vunpack.c.h.bf16 %v558
    %v733 = vunpack.c.l.bf16 %v559
    %v734 = vunpack.c.h.bf16 %v559
    %v735 = vunpack.c.l.bf16 %v560
    %v736 = vunpack.c.h.bf16 %v560
    %v737 = vunpack.c.l.bf16 %v561
    %v738 = vunpack.c.h.bf16 %v561
    %v739 = vunpack.c.l.bf16 %v562
    %v740 = vunpack.c.h.bf16 %v562
    %v741 = vunpack.c.l.bf16 %v563
    %v742 = vunpack.c.h.bf16 %v563
    %v743 = vunpack.c.l.bf16 %v564
    %v744 = vunpack.c.h.bf16 %v564
    %v745 = vunpack.c.l.bf16 %v565
    %v746 = vunpack.c.h.bf16 %v565
    %v747 = vunpack.c.l.bf16 %v566
    %v748 = vunpack.c.h.bf16 %v566
    %v749 = vunpack.c.l.bf16 %v567
    %v750 = vunpack.c.h.bf16 %v567
    %v751 = vunpack.c.l.bf16 %v568
    %v752 = vunpack.c.h.bf16 %v568
    %v753 = vunpack.c.l.bf16 %v569
    %v754 = vunpack.c.h.bf16 %v569
    %v755 = vunpack.c.l.bf16 %v570
    %v756 = vunpack.c.h.bf16 %v570
    %v757 = vunpack.c.l.bf16 %v571
    %v758 = vunpack.c.h.bf16 %v571
    %v759 = vunpack.c.l.bf16 %v572
    %v760 = vunpack.c.h.bf16 %v572
    %v761 = vunpack.c.l.bf16 %v573
    %v762 = vunpack.c.h.bf16 %v573
    %v763 = vunpack.c.l.bf16 %v574
    %v764 = vunpack.c.h.bf16 %v574
    %v765 = vunpack.c.l.bf16 %v575
    %v766 = vunpack.c.h.bf16 %v575
    %v767 = vunpack.c.l.bf16 %v576
    %v768 = vunpack.c.h.bf16 %v576
    %v769 = vunpack.c.l.bf16 %v577
    %v770 = vunpack.c.h.bf16 %v577
    %v771 = vunpack.c.l.bf16 %v578
    %v772 = vunpack.c.h.bf16 %v578
    %v773 = vunpack.c.l.bf16 %v579
    %v774 = vunpack.c.h.bf16 %v579
    %v775 = vunpack.c.l.bf16 %v580
    %v776 = vunpack.c.h.bf16 %v580
    %v777 = vunpack.c.l.bf16 %v581
    %v778 = vunpack.c.h.bf16 %v581
    %v779 = vunpack.c.l.bf16 %v582
    %v780 = vunpack.c.h.bf16 %v582
    %v781 = vunpack.c.l.bf16 %v583
    %v782 = vunpack.c.h.bf16 %v583
    %v783 = vunpack.c.l.bf16 %v584
    %v784 = vunpack.c.h.bf16 %v584
    %v785 = vunpack.c.l.bf16 %v585
    %v786 = vunpack.c.h.bf16 %v585
    %v787 = vunpack.c.l.bf16 %v586
    %v788 = vunpack.c.h.bf16 %v586
    %v789 = vunpack.c.l.bf16 %v587
    %v790 = vunpack.c.h.bf16 %v587
    %v791 = vunpack.c.l.bf16 %v588
    %v792 = vunpack.c.h.bf16 %v588
    %v793 = vunpack.c.l.bf16 %v589
    %v794 = vunpack.c.h.bf16 %v589
    %v795 = vunpack.c.l.bf16 %v590
    %v796 = vunpack.c.h.bf16 %v590
    %v797 = vunpack.c.l.bf16 %v591
    %v798 = vunpack.c.h.bf16 %v591
    %v799 = vunpack.c.l.bf16 %v592
    %v800 = vunpack.c.h.bf16 %v592
    %v801 = vunpack.c.l.bf16 %v593
    %v802 = vunpack.c.h.bf16 %v593
    %v803 = vunpack.c.l.bf16 %v594
    %v804 = vunpack.c.h.bf16 %v594
    %v805 = vunpack.c.l.bf16 %v595
    %v806 = vunpack.c.h.bf16 %v595
    %v807 = vunpack.c.l.bf16 %v596
    %v808 = vunpack.c.h.bf16 %v596
    %v809 = vunpack.c.l.bf16 %v597
    %v810 = vunpack.c.h.bf16 %v597
    %v811 = vunpack.c.l.bf16 %v598
    %v812 = vunpack.c.h.bf16 %v598
    %v813 = vunpack.c.l.bf16 %v599
    %v814 = vunpack.c.h.bf16 %v599
    %v815 = vunpack.c.l.bf16 %v600
    %v816 = vunpack.c.h.bf16 %v600
    %v817 = vunpack.c.l.bf16 %v601
    %v818 = vunpack.c.h.bf16 %v601
    %v819 = vunpack.c.l.bf16 %v602
    %v820 = vunpack.c.h.bf16 %v602
    %v821 = vunpack.c.l.bf16 %v603
    %v822 = vunpack.c.h.bf16 %v603
    %v823 = vunpack.c.l.bf16 %v604
    %v824 = vunpack.c.h.bf16 %v604
    %v825 = vunpack.c.l.bf16 %v605
    %v826 = vunpack.c.h.bf16 %v605
    %v827 = vunpack.c.l.bf16 %v606
    %v828 = vunpack.c.h.bf16 %v606
    %v829 = vunpack.c.l.bf16 %v607
    %v830 = vunpack.c.h.bf16 %v607
    %v831 = vunpack.c.l.bf16 %v608
    %v832 = vunpack.c.h.bf16 %v608
    %v833 = vunpack.c.l.bf16 %v609
    %v834 = vunpack.c.h.bf16 %v609
    %v835 = vunpack.c.l.bf16 %v610
    %v836 = vunpack.c.h.bf16 %v610
    %v837 = vunpack.c.l.bf16 %v611
    %v838 = vunpack.c.h.bf16 %v611
    %v839 = vunpack.c.l.bf16 %v612
    %v840 = vunpack.c.h.bf16 %v612
    %v841 = vunpack.c.l.bf16 %v613
    %v842 = vunpack.c.h.bf16 %v613
    %v843 = vunpack.c.l.bf16 %v614
    %v844 = vunpack.c.h.bf16 %v614
    %v845 = vunpack.c.l.bf16 %v615
    %v846 = vunpack.c.h.bf16 %v615
    %v847 = vunpack.c.l.bf16 %v616
    %v848 = vunpack.c.h.bf16 %v616
    %v849 = vunpack.c.l.bf16 %v617
    %v850 = vunpack.c.h.bf16 %v617
    %v851 = vunpack.c.l.bf16 %v618
    %v852 = vunpack.c.h.bf16 %v618
    %v853 = vunpack.c.l.bf16 %v619
    %v854 = vunpack.c.h.bf16 %v619
    %v855 = vunpack.c.l.bf16 %v620
    %v856 = vunpack.c.h.bf16 %v620
    %v857 = vunpack.c.l.bf16 %v621
    %v858 = vunpack.c.h.bf16 %v621
    %v859 = vunpack.c.l.bf16 %v622
    %v860 = vunpack.c.h.bf16 %v622
    %v861 = vunpack.c.l.bf16 %v623
    %v862 = vunpack.c.h.bf16 %v623
    %v863 = vunpack.c.l.bf16 %v624
    %v864 = vunpack.c.h.bf16 %v624
    %v865 = vunpack.c.l.bf16 %v625
    %v866 = vunpack.c.h.bf16 %v625
    %v867 = vunpack.c.l.bf16 %v626
    %v868 = vunpack.c.h.bf16 %v626
    %v869 = vunpack.c.l.bf16 %v627
    %v870 = vunpack.c.h.bf16 %v627
    %v871 = vunpack.c.l.bf16 %v628
    %v872 = vunpack.c.h.bf16 %v628
    %v873 = vunpack.c.l.bf16 %v629
    %v874 = vunpack.c.h.bf16 %v629
    %v875 = vunpack.c.l.bf16 %v630
    %v876 = vunpack.c.h.bf16 %v630
    %v877 = vunpack.c.l.bf16 %v631
    %v878 = vunpack.c.h.bf16 %v631
    %v879 = vunpack.c.l.bf16 %v632
    %v880 = vunpack.c.h.bf16 %v632
    %v881 = vunpack.c.l.bf16 %v633
    %v882 = vunpack.c.h.bf16 %v633
    %v883 = vunpack.c.l.bf16 %v634
    %v884 = vunpack.c.h.bf16 %v634
    %v885 = vunpack.c.l.bf16 %v635
    %v886 = vunpack.c.h.bf16 %v635
    %v887 = vunpack.c.l.bf16 %v636
    %v888 = vunpack.c.h.bf16 %v636
    %v889 = vunpack.c.l.bf16 %v637
    %v890 = vunpack.c.h.bf16 %v637
    %v891 = vunpack.c.l.bf16 %v638
    %v892 = vunpack.c.h.bf16 %v638
    %v893 = vunpack.c.l.bf16 %v639
    %v894 = vunpack.c.h.bf16 %v639
    %v895 = vunpack.c.l.bf16 %v640
    %v896 = vunpack.c.h.bf16 %v640
    %897 = vmatprep.subr.mxu0 %v642
    %898 = vmatpush1.msra.mxu0 %v641
    %899 = vmatprep.subr.mxu0 %v646
    %900 = vmatpush1.msra.mxu0 %v645
    %901 = vmatprep.subr.mxu0 %v650
    %902 = vmatpush1.msra.mxu0 %v649
    %903 = vmatprep.subr.mxu0 %v654
    %904 = vmatpush1.msra.mxu0 %v653
    %905 = vmatprep.subr.mxu0 %v658
    %906 = vmatpush1.msra.mxu0 %v657
    %907 = vmatprep.subr.mxu0 %v662
    %908 = vmatpush1.msra.mxu0 %v661
    %909 = vmatprep.subr.mxu0 %v666
    %910 = vmatpush1.msra.mxu0 %v665
    %911 = vmatprep.subr.mxu0 %v670
    %912 = vmatpush1.msra.mxu0 %v669
    %913 = vmatprep.subr.mxu0 %v674
    %914 = vmatpush1.msra.mxu0 %v673
    %915 = vmatprep.subr.mxu0 %v678
    %916 = vmatpush1.msra.mxu0 %v677
    %917 = vmatprep.subr.mxu0 %v682
    %918 = vmatpush1.msra.mxu0 %v681
    %919 = vmatprep.subr.mxu0 %v686
    %920 = vmatpush1.msra.mxu0 %v685
    %921 = vmatprep.subr.mxu0 %v690
    %922 = vmatpush1.msra.mxu0 %v689
    %923 = vmatprep.subr.mxu0 %v694
    %924 = vmatpush1.msra.mxu0 %v693
    %925 = vmatprep.subr.mxu0 %v698
    %926 = vmatpush1.msra.mxu0 %v697
    %927 = vmatprep.subr.mxu0 %v702
    %928 = vmatpush1.msra.mxu0 %v701
    %929 = vmatprep.subr.mxu0 %v706
    %930 = vmatpush1.msra.mxu0 %v705
    %931 = vmatprep.subr.mxu0 %v710
    %932 = vmatpush1.msra.mxu0 %v709
    %933 = vmatprep.subr.mxu0 %v714
    %934 = vmatpush1.msra.mxu0 %v713
    %935 = vmatprep.subr.mxu0 %v718
    %936 = vmatpush1.msra.mxu0 %v717
    %937 = vmatprep.subr.mxu0 %v722
    %938 = vmatpush1.msra.mxu0 %v721
    %939 = vmatprep.subr.mxu0 %v726
    %940 = vmatpush1.msra.mxu0 %v725
    %941 = vmatprep.subr.mxu0 %v730
    %942 = vmatpush1.msra.mxu0 %v729
    %943 = vmatprep.subr.mxu0 %v734
    %944 = vmatpush1.msra.mxu0 %v733
    %945 = vmatprep.subr.mxu0 %v738
    %946 = vmatpush1.msra.mxu0 %v737
    %947 = vmatprep.subr.mxu0 %v742
    %948 = vmatpush1.msra.mxu0 %v741
    %949 = vmatprep.subr.mxu0 %v746
    %950 = vmatpush1.msra.mxu0 %v745
    %951 = vmatprep.subr.mxu0 %v750
    %952 = vmatpush1.msra.mxu0 %v749
    %953 = vmatprep.subr.mxu0 %v754
    %954 = vmatpush1.msra.mxu0 %v753
    %955 = vmatprep.subr.mxu0 %v758
    %956 = vmatpush1.msra.mxu0 %v757
    %957 = vmatprep.subr.mxu0 %v762
    %958 = vmatpush1.msra.mxu0 %v761
    %959 = vmatprep.subr.mxu0 %v766
    %960 = vmatpush1.msra.mxu0 %v765
    %961 = vmatprep.mubr.f32.mxu0 %v510
    %962 = vmatmul.mubr.f32.gmra.mrb[0].mxu0 %v509
    %v963 = vpop.f32.mrb[0].mxu0
    %v964 = vadd.f32 0.0, %v963
    %v965 = vpop.f32.mrb[0].mxu0
    %v966 = vadd.f32 0.0, %v965
    %967 = vdwg.mxu0
    %968 = vmatprep.subr.mxu0 %v770
    %969 = vmatpush1.msra.mxu0 %v769
    %970 = vmatprep.subr.mxu0 %v774
    %971 = vmatpush1.msra.mxu0 %v773
    %972 = vmatprep.subr.mxu0 %v778
    %973 = vmatpush1.msra.mxu0 %v777
    %974 = vmatprep.subr.mxu0 %v782
    %975 = vmatpush1.msra.mxu0 %v781
    %976 = vmatprep.subr.mxu0 %v786
    %977 = vmatpush1.msra.mxu0 %v785
    %978 = vmatprep.subr.mxu0 %v790
    %979 = vmatpush1.msra.mxu0 %v789
    %980 = vmatprep.subr.mxu0 %v794
    %981 = vmatpush1.msra.mxu0 %v793
    %982 = vmatprep.subr.mxu0 %v798
    %983 = vmatpush1.msra.mxu0 %v797
    %984 = vmatprep.subr.mxu0 %v802
    %985 = vmatpush1.msra.mxu0 %v801
    %986 = vmatprep.subr.mxu0 %v806
    %987 = vmatpush1.msra.mxu0 %v805
    %988 = vmatprep.subr.mxu0 %v810
    %989 = vmatpush1.msra.mxu0 %v809
    %990 = vmatprep.subr.mxu0 %v814
    %991 = vmatpush1.msra.mxu0 %v813
    %992 = vmatprep.subr.mxu0 %v818
    %993 = vmatpush1.msra.mxu0 %v817
    %994 = vmatprep.subr.mxu0 %v822
    %995 = vmatpush1.msra.mxu0 %v821
    %996 = vmatprep.subr.mxu0 %v826
    %997 = vmatpush1.msra.mxu0 %v825
    %998 = vmatprep.subr.mxu0 %v830
    %999 = vmatpush1.msra.mxu0 %v829
    %1000 = vmatprep.subr.mxu0 %v834
    %1001 = vmatpush1.msra.mxu0 %v833
    %1002 = vmatprep.subr.mxu0 %v838
    %1003 = vmatpush1.msra.mxu0 %v837
    %1004 = vmatprep.subr.mxu0 %v842
    %1005 = vmatpush1.msra.mxu0 %v841
    %1006 = vmatprep.subr.mxu0 %v846
    %1007 = vmatpush1.msra.mxu0 %v845
    %1008 = vmatprep.subr.mxu0 %v850
    %1009 = vmatpush1.msra.mxu0 %v849
    %1010 = vmatprep.subr.mxu0 %v854
    %1011 = vmatpush1.msra.mxu0 %v853
    %1012 = vmatprep.subr.mxu0 %v858
    %1013 = vmatpush1.msra.mxu0 %v857
    %1014 = vmatprep.subr.mxu0 %v862
    %1015 = vmatpush1.msra.mxu0 %v861
    %1016 = vmatprep.subr.mxu0 %v866
    %1017 = vmatpush1.msra.mxu0 %v865
    %1018 = vmatprep.subr.mxu0 %v870
    %1019 = vmatpush1.msra.mxu0 %v869
    %1020 = vmatprep.subr.mxu0 %v874
    %1021 = vmatpush1.msra.mxu0 %v873
    %1022 = vmatprep.subr.mxu0 %v878
    %1023 = vmatpush1.msra.mxu0 %v877
    %1024 = vmatprep.subr.mxu0 %v882
    %1025 = vmatpush1.msra.mxu0 %v881
    %1026 = vmatprep.subr.mxu0 %v886
    %1027 = vmatpush1.msra.mxu0 %v885
    %1028 = vmatprep.subr.mxu0 %v890
    %1029 = vmatpush1.msra.mxu0 %v889
    %1030 = vmatprep.subr.mxu0 %v894
    %1031 = vmatpush1.msra.mxu0 %v893
    %1032 = vmatprep.mubr.f32.mxu0 %v512
    %1033 = vmatmul.mubr.f32.gmra.mrb[0].mxu0 %v511
    %v1034 = vpop.f32.mrb[0].mxu0
    %v1035 = vadd.f32 %v964, %v1034
    %v1036 = vpop.f32.mrb[0].mxu0
    %v1037 = vadd.f32 %v966, %v1036
    %1038 = vdwg.mxu0
    %1039 = vmatprep.subr.mxu0 %v644
    %1040 = vmatpush1.msra.mxu0 %v643
    %1041 = vmatprep.subr.mxu0 %v648
    %1042 = vmatpush1.msra.mxu0 %v647
    %1043 = vmatprep.subr.mxu0 %v652
    %1044 = vmatpush1.msra.mxu0 %v651
    %1045 = vmatprep.subr.mxu0 %v656
    %1046 = vmatpush1.msra.mxu0 %v655
    %1047 = vmatprep.subr.mxu0 %v660
    %1048 = vmatpush1.msra.mxu0 %v659
    %1049 = vmatprep.subr.mxu0 %v664
    %1050 = vmatpush1.msra.mxu0 %v663
    %1051 = vmatprep.subr.mxu0 %v668
    %1052 = vmatpush1.msra.mxu0 %v667
    %1053 = vmatprep.subr.mxu0 %v672
    %1054 = vmatpush1.msra.mxu0 %v671
    %1055 = vmatprep.subr.mxu0 %v676
    %1056 = vmatpush1.msra.mxu0 %v675
    %1057 = vmatprep.subr.mxu0 %v680
    %1058 = vmatpush1.msra.mxu0 %v679
    %1059 = vmatprep.subr.mxu0 %v684
    %1060 = vmatpush1.msra.mxu0 %v683
    %1061 = vmatprep.subr.mxu0 %v688
    %1062 = vmatpush1.msra.mxu0 %v687
    %1063 = vmatprep.subr.mxu0 %v692
    %1064 = vmatpush1.msra.mxu0 %v691
    %1065 = vmatprep.subr.mxu0 %v696
    %1066 = vmatpush1.msra.mxu0 %v695
    %1067 = vmatprep.subr.mxu0 %v700
    %1068 = vmatpush1.msra.mxu0 %v699
    %1069 = vmatprep.subr.mxu0 %v704
    %1070 = vmatpush1.msra.mxu0 %v703
    %1071 = vmatprep.subr.mxu0 %v708
    %1072 = vmatpush1.msra.mxu0 %v707
    %1073 = vmatprep.subr.mxu0 %v712
    %1074 = vmatpush1.msra.mxu0 %v711
    %1075 = vmatprep.subr.mxu0 %v716
    %1076 = vmatpush1.msra.mxu0 %v715
    %1077 = vmatprep.subr.mxu0 %v720
    %1078 = vmatpush1.msra.mxu0 %v719
    %1079 = vmatprep.subr.mxu0 %v724
    %1080 = vmatpush1.msra.mxu0 %v723
    %1081 = vmatprep.subr.mxu0 %v728
    %1082 = vmatpush1.msra.mxu0 %v727
    %1083 = vmatprep.subr.mxu0 %v732
    %1084 = vmatpush1.msra.mxu0 %v731
    %1085 = vmatprep.subr.mxu0 %v736
    %1086 = vmatpush1.msra.mxu0 %v735
    %1087 = vmatprep.subr.mxu0 %v740
    %1088 = vmatpush1.msra.mxu0 %v739
    %1089 = vmatprep.subr.mxu0 %v744
    %1090 = vmatpush1.msra.mxu0 %v743
    %1091 = vmatprep.subr.mxu0 %v748
    %1092 = vmatpush1.msra.mxu0 %v747
    %1093 = vmatprep.subr.mxu0 %v752
    %1094 = vmatpush1.msra.mxu0 %v751
    %1095 = vmatprep.subr.mxu0 %v756
    %1096 = vmatpush1.msra.mxu0 %v755
    %1097 = vmatprep.subr.mxu0 %v760
    %1098 = vmatpush1.msra.mxu0 %v759
    %1099 = vmatprep.subr.mxu0 %v764
    %1100 = vmatpush1.msra.mxu0 %v763
    %1101 = vmatprep.subr.mxu0 %v768
    %1102 = vmatpush1.msra.mxu0 %v767
    %1103 = vmatprep.mubr.f32.mxu0 %v510
    %1104 = vmatmul.mubr.f32.gmra.mrb[0].mxu0 %v509
    %v1105 = vpop.f32.mrb[0].mxu0
    %v1106 = vadd.f32 0.0, %v1105
    %v1107 = vpop.f32.mrb[0].mxu0
    %v1108 = vadd.f32 0.0, %v1107
    %1109 = vdwg.mxu0
    %1110 = vmatprep.subr.mxu0 %v772
    %1111 = vmatpush1.msra.mxu0 %v771
    %1112 = vmatprep.subr.mxu0 %v776
    %1113 = vmatpush1.msra.mxu0 %v775
    %1114 = vmatprep.subr.mxu0 %v780
    %1115 = vmatpush1.msra.mxu0 %v779
    %1116 = vmatprep.subr.mxu0 %v784
    %1117 = vmatpush1.msra.mxu0 %v783
    %1118 = vmatprep.subr.mxu0 %v788
    %1119 = vmatpush1.msra.mxu0 %v787
    %1120 = vmatprep.subr.mxu0 %v792
    %1121 = vmatpush1.msra.mxu0 %v791
    %1122 = vmatprep.subr.mxu0 %v796
    %1123 = vmatpush1.msra.mxu0 %v795
    %1124 = vmatprep.subr.mxu0 %v800
    %1125 = vmatpush1.msra.mxu0 %v799
    %1126 = vmatprep.subr.mxu0 %v804
    %1127 = vmatpush1.msra.mxu0 %v803
    %1128 = vmatprep.subr.mxu0 %v808
    %1129 = vmatpush1.msra.mxu0 %v807
    %1130 = vmatprep.subr.mxu0 %v812
    %1131 = vmatpush1.msra.mxu0 %v811
    %1132 = vmatprep.subr.mxu0 %v816
    %1133 = vmatpush1.msra.mxu0 %v815
    %1134 = vmatprep.subr.mxu0 %v820
    %1135 = vmatpush1.msra.mxu0 %v819
    %1136 = vmatprep.subr.mxu0 %v824
    %1137 = vmatpush1.msra.mxu0 %v823
    %1138 = vmatprep.subr.mxu0 %v828
    %1139 = vmatpush1.msra.mxu0 %v827
    %1140 = vmatprep.subr.mxu0 %v832
    %1141 = vmatpush1.msra.mxu0 %v831
    %1142 = vmatprep.subr.mxu0 %v836
    %1143 = vmatpush1.msra.mxu0 %v835
    %1144 = vmatprep.subr.mxu0 %v840
    %1145 = vmatpush1.msra.mxu0 %v839
    %1146 = vmatprep.subr.mxu0 %v844
    %1147 = vmatpush1.msra.mxu0 %v843
    %1148 = vmatprep.subr.mxu0 %v848
    %1149 = vmatpush1.msra.mxu0 %v847
    %1150 = vmatprep.subr.mxu0 %v852
    %1151 = vmatpush1.msra.mxu0 %v851
    %1152 = vmatprep.subr.mxu0 %v856
    %1153 = vmatpush1.msra.mxu0 %v855
    %1154 = vmatprep.subr.mxu0 %v860
    %1155 = vmatpush1.msra.mxu0 %v859
    %1156 = vmatprep.subr.mxu0 %v864
    %1157 = vmatpush1.msra.mxu0 %v863
    %1158 = vmatprep.subr.mxu0 %v868
    %1159 = vmatpush1.msra.mxu0 %v867
    %1160 = vmatprep.subr.mxu0 %v872
    %1161 = vmatpush1.msra.mxu0 %v871
    %1162 = vmatprep.subr.mxu0 %v876
    %1163 = vmatpush1.msra.mxu0 %v875
    %1164 = vmatprep.subr.mxu0 %v880
    %1165 = vmatpush1.msra.mxu0 %v879
    %1166 = vmatprep.subr.mxu0 %v884
    %1167 = vmatpush1.msra.mxu0 %v883
    %1168 = vmatprep.subr.mxu0 %v888
    %1169 = vmatpush1.msra.mxu0 %v887
    %1170 = vmatprep.subr.mxu0 %v892
    %1171 = vmatpush1.msra.mxu0 %v891
    %1172 = vmatprep.subr.mxu0 %v896
    %1173 = vmatpush1.msra.mxu0 %v895
    %1174 = vmatprep.mubr.f32.mxu0 %v512
    %1175 = vmatmul.mubr.f32.gmra.mrb[0].mxu0 %v511
    %v1176 = vpop.f32.mrb[0].mxu0
    %v1177 = vadd.f32 %v1106, %v1176
    %v1178 = vpop.f32.mrb[0].mxu0
    %v1179 = vadd.f32 %v1108, %v1178
    %1180 = vdwg.mxu0
    %v1181 = vld [vmem:[%s5] sm:$0xf]
    %v1182 = vld [vmem:[%s6] sm:$0xf]
    %v1183 = vrot.slane %v1035, 4
    %v1184 = vadd.f32 %v1035, %v1183
    %v1185 = vrot.slane %v1184, 2
    %v1186 = vadd.f32 %v1184, %v1185
    %v1187 = vrot.slane %v1186, 1
    %v1188 = vadd.f32 %v1186, %v1187
    %v1189 = vrot.slane %v1037, 4
    %v1190 = vadd.f32 %v1037, %v1189
    %v1191 = vrot.slane %v1190, 2
    %v1192 = vadd.f32 %v1190, %v1191
    %v1193 = vrot.slane %v1192, 1
    %v1194 = vadd.f32 %v1192, %v1193
    %v1195 = vrot.slane %v1177, 4
    %v1196 = vadd.f32 %v1177, %v1195
    %v1197 = vrot.slane %v1196, 2
    %v1198 = vadd.f32 %v1196, %v1197
    %v1199 = vrot.slane %v1198, 1
    %v1200 = vadd.f32 %v1198, %v1199
    %v1201 = vrot.slane %v1179, 4
    %v1202 = vadd.f32 %v1179, %v1201
    %v1203 = vrot.slane %v1202, 2
    %v1204 = vadd.f32 %v1202, %v1203
    %v1205 = vrot.slane %v1204, 1
    %v1206 = vadd.f32 %v1204, %v1205
    %v1207 = vmul.f32 %v1188, 0.125
    %v1208 = vmul.f32 %v1194, 0.125
    %v1209 = vmul.f32 %v1200, 0.125
    %v1210 = vmul.f32 %v1206, 0.125
    %v1211 = vmul.f32 %v1035, %v1035
    %v1212 = vmul.f32 %v1037, %v1037
    %v1213 = vmul.f32 %v1177, %v1177
    %v1214 = vmul.f32 %v1179, %v1179
    %v1215 = vrot.slane %v1211, 4
    %v1216 = vadd.f32 %v1211, %v1215
    %v1217 = vrot.slane %v1216, 2
    %v1218 = vadd.f32 %v1216, %v1217
    %v1219 = vrot.slane %v1218, 1
    %v1220 = vadd.f32 %v1218, %v1219
    %v1221 = vrot.slane %v1212, 4
    %v1222 = vadd.f32 %v1212, %v1221
    %v1223 = vrot.slane %v1222, 2
    %v1224 = vadd.f32 %v1222, %v1223
    %v1225 = vrot.slane %v1224, 1
    %v1226 = vadd.f32 %v1224, %v1225
    %v1227 = vrot.slane %v1213, 4
    %v1228 = vadd.f32 %v1213, %v1227
    %v1229 = vrot.slane %v1228, 2
    %v1230 = vadd.f32 %v1228, %v1229
    %v1231 = vrot.slane %v1230, 1
    %v1232 = vadd.f32 %v1230, %v1231
    %v1233 = vrot.slane %v1214, 4
    %v1234 = vadd.f32 %v1214, %v1233
    %v1235 = vrot.slane %v1234, 2
    %v1236 = vadd.f32 %v1234, %v1235
    %v1237 = vrot.slane %v1236, 1
    %v1238 = vadd.f32 %v1236, %v1237
    %v1239 = vmul.f32 %v1220, 0.125
    %v1240 = vmul.f32 %v1226, 0.125
    %v1241 = vmul.f32 %v1232, 0.125
    %v1242 = vmul.f32 %v1238, 0.125
    %v1243 = vmul.f32 %v1207, %v1207
    %v1244 = vmul.f32 %v1208, %v1208
    %v1245 = vmul.f32 %v1209, %v1209
    %v1246 = vmul.f32 %v1210, %v1210
    %v1247 = vsub.f32 %v1239, %v1243
    %v1248 = vsub.f32 %v1240, %v1244
    %v1249 = vsub.f32 %v1241, %v1245
    %v1250 = vsub.f32 %v1242, %v1246
    %v1251 = vmax.f32 %v1247, 0.0
    %v1252 = vmax.f32 %v1248, 0.0
    %v1253 = vmax.f32 %v1249, 0.0
    %v1254 = vmax.f32 %v1250, 0.0
    %v1255 = vadd.f32 %v1251, 1e-05
    %v1256 = vadd.f32 %v1252, 1e-05
    %v1257 = vadd.f32 %v1253, 1e-05
    %v1258 = vadd.f32 %v1254, 1e-05
    %v1259 = vrsqrt.pop %v1255
    %v1260 = vrsqrt.pop %v1256
    %v1261 = vrsqrt.pop %v1257
    %v1262 = vrsqrt.pop %v1258
    %v1267 = vcombine.low %v1259, %v1260
    %v1268 = vcombine.low %v1261, %v1262
    %v1270 = vunpack.c.l.s4 1966171168
    %v1271 = vunpack.c.0.s8 %v1270
    %v1272 = vlaneseq
    %v1273 = vshrl.u32 %v1272, 7
    %v1274 = vsub.s32 %v1271, %v1273
    %v1275 = vrot.slane %v1267, %v1274
    %v1277 = vunpack.c.l.s4 1966171168
    %v1278 = vunpack.c.0.s8 %v1277
    %v1279 = vlaneseq
    %v1280 = vshrl.u32 %v1279, 7
    %v1281 = vsub.s32 %v1278, %v1280
    %v1282 = vrot.slane %v1268, %v1281
    %v1283 = vcombine.low %v1275, %v1282
    %v1285 = vunpack.c.l.s4 1966171168
    %v1286 = vunpack.c.0.s8 %v1285
    %v1287 = vlaneseq
    %v1288 = vshrl.u32 %v1287, 7
    %v1289 = vsub.s32 %v1286, %v1288
    %v1290 = vrot.slane %v1283, %v1289
    %v1292 = vmul.f32 %v1181, %v1290
    %v1294 = vlaneseq
    %v1295 = vshrl.u32 %v1294, 7
    %v1296 = vsub.s32 0, %v1295
    %v1297 = vrot.slane %v1292, %v1296
    %v1298 = vlaneseq
    %v1299 = vshrl.u32 %v1298, 7
    %v1300 = vsub.s32 1, %v1299
    %v1301 = vrot.slane %v1292, %v1300
    %v1302 = vlaneseq
    %v1303 = vshrl.u32 %v1302, 7
    %v1304 = vsub.s32 2, %v1303
    %v1305 = vrot.slane %v1292, %v1304
    %v1306 = vlaneseq
    %v1307 = vshrl.u32 %v1306, 7
    %v1308 = vsub.s32 3, %v1307
    %v1309 = vrot.slane %v1292, %v1308
    %v1314 = vmul.f32 %v1207, %v1297
    %v1315 = vmul.f32 %v1208, %v1301
    %v1316 = vmul.f32 %v1209, %v1305
    %v1317 = vmul.f32 %v1210, %v1309
    %v1322 = vcombine.low %v1314, %v1315
    %v1323 = vcombine.low %v1316, %v1317
    %v1325 = vunpack.c.l.s4 1966171168
    %v1326 = vunpack.c.0.s8 %v1325
    %v1327 = vlaneseq
    %v1328 = vshrl.u32 %v1327, 7
    %v1329 = vsub.s32 %v1326, %v1328
    %v1330 = vrot.slane %v1322, %v1329
    %v1332 = vunpack.c.l.s4 1966171168
    %v1333 = vunpack.c.0.s8 %v1332
    %v1334 = vlaneseq
    %v1335 = vshrl.u32 %v1334, 7
    %v1336 = vsub.s32 %v1333, %v1335
    %v1337 = vrot.slane %v1323, %v1336
    %v1338 = vcombine.low %v1330, %v1337
    %v1340 = vunpack.c.l.s4 1966171168
    %v1341 = vunpack.c.0.s8 %v1340
    %v1342 = vlaneseq
    %v1343 = vshrl.u32 %v1342, 7
    %v1344 = vsub.s32 %v1341, %v1343
    %v1345 = vrot.slane %v1338, %v1344
    %v1347 = vsub.f32 %v1182, %v1345
    %v1348 = vmul.f32 %v1035, %v1297
    %v1349 = vmul.f32 %v1037, %v1301
    %v1350 = vmul.f32 %v1177, %v1305
    %v1351 = vmul.f32 %v1179, %v1309
    %v1353 = vlaneseq
    %v1354 = vshrl.u32 %v1353, 7
    %v1355 = vsub.s32 0, %v1354
    %v1356 = vrot.slane %v1347, %v1355
    %v1357 = vlaneseq
    %v1358 = vshrl.u32 %v1357, 7
    %v1359 = vsub.s32 1, %v1358
    %v1360 = vrot.slane %v1347, %v1359
    %v1361 = vlaneseq
    %v1362 = vshrl.u32 %v1361, 7
    %v1363 = vsub.s32 2, %v1362
    %v1364 = vrot.slane %v1347, %v1363
    %v1365 = vlaneseq
    %v1366 = vshrl.u32 %v1365, 7
    %v1367 = vsub.s32 3, %v1366
    %v1368 = vrot.slane %v1347, %v1367
    %v1373 = vadd.f32 %v1348, %v1356
    %v1374 = vadd.f32 %v1349, %v1360
    %v1375 = vadd.f32 %v1350, %v1364
    %v1376 = vadd.f32 %v1351, %v1368
    %v1377 = vmax.f32 %v1373, 0.0
    %v1378 = vmax.f32 %v1374, 0.0
    %v1379 = vmax.f32 %v1375, 0.0
    %v1380 = vmax.f32 %v1376, 0.0
    %v1381 = vld [vmem:[#allocation7] sm:$0xf]
    %v1382 = vld [vmem:[#allocation7 + $0x4] sm:$0xf]
    %v1383 = vld [vmem:[#allocation7 + $0x8] sm:$0xf]
    %v1384 = vld [vmem:[#allocation7 + $0xc] sm:$0xf]
    %v1385 = vld [vmem:[#allocation7 + $0x10] sm:$0xf]
    %v1386 = vld [vmem:[#allocation7 + $0x14] sm:$0xf]
    %v1387 = vld [vmem:[#allocation7 + $0x18] sm:$0xf]
    %v1388 = vld [vmem:[#allocation7 + $0x1c] sm:$0xf]
    %v1389 = vld [vmem:[#allocation7 + $0x20] sm:$0xf]
    %v1390 = vld [vmem:[#allocation7 + $0x24] sm:$0xf]
    %v1391 = vld [vmem:[#allocation7 + $0x28] sm:$0xf]
    %v1392 = vld [vmem:[#allocation7 + $0x2c] sm:$0xf]
    %v1393 = vld [vmem:[#allocation7 + $0x30] sm:$0xf]
    %v1394 = vld [vmem:[#allocation7 + $0x34] sm:$0xf]
    %v1395 = vld [vmem:[#allocation7 + $0x38] sm:$0xf]
    %v1396 = vld [vmem:[#allocation7 + $0x3c] sm:$0xf]
    %v1397 = vld [vmem:[#allocation7 + $0x40] sm:$0xf]
    %v1398 = vld [vmem:[#allocation7 + $0x44] sm:$0xf]
    %v1399 = vld [vmem:[#allocation7 + $0x48] sm:$0xf]
    %v1400 = vld [vmem:[#allocation7 + $0x4c] sm:$0xf]
    %v1401 = vld [vmem:[#allocation7 + $0x50] sm:$0xf]
    %v1402 = vld [vmem:[#allocation7 + $0x54] sm:$0xf]
    %v1403 = vld [vmem:[#allocation7 + $0x58] sm:$0xf]
    %v1404 = vld [vmem:[#allocation7 + $0x5c] sm:$0xf]
    %v1405 = vld [vmem:[#allocation7 + $0x60] sm:$0xf]
    %v1406 = vld [vmem:[#allocation7 + $0x64] sm:$0xf]
    %v1407 = vld [vmem:[#allocation7 + $0x68] sm:$0xf]
    %v1408 = vld [vmem:[#allocation7 + $0x6c] sm:$0xf]
    %v1409 = vld [vmem:[#allocation7 + $0x70] sm:$0xf]
    %v1410 = vld [vmem:[#allocation7 + $0x74] sm:$0xf]
    %v1411 = vld [vmem:[#allocation7 + $0x78] sm:$0xf]
    %v1412 = vld [vmem:[#allocation7 + $0x7c] sm:$0xf]
    %v1413 = vld [vmem:[#allocation7 + $0x80] sm:$0xf]
    %v1414 = vld [vmem:[#allocation7 + $0x84] sm:$0xf]
    %v1415 = vld [vmem:[#allocation7 + $0x88] sm:$0xf]
    %v1416 = vld [vmem:[#allocation7 + $0x8c] sm:$0xf]
    %v1417 = vld [vmem:[#allocation7 + $0x90] sm:$0xf]
    %v1418 = vld [vmem:[#allocation7 + $0x94] sm:$0xf]
    %v1419 = vld [vmem:[#allocation7 + $0x98] sm:$0xf]
    %v1420 = vld [vmem:[#allocation7 + $0x9c] sm:$0xf]
    %v1421 = vld [vmem:[#allocation7 + $0xa0] sm:$0xf]
    %v1422 = vld [vmem:[#allocation7 + $0xa4] sm:$0xf]
    %v1423 = vld [vmem:[#allocation7 + $0xa8] sm:$0xf]
    %v1424 = vld [vmem:[#allocation7 + $0xac] sm:$0xf]
    %v1425 = vld [vmem:[#allocation7 + $0xb0] sm:$0xf]
    %v1426 = vld [vmem:[#allocation7 + $0xb4] sm:$0xf]
    %v1427 = vld [vmem:[#allocation7 + $0xb8] sm:$0xf]
    %v1428 = vld [vmem:[#allocation7 + $0xbc] sm:$0xf]
    %v1429 = vld [vmem:[#allocation7 + $0xc0] sm:$0xf]
    %v1430 = vld [vmem:[#allocation7 + $0xc4] sm:$0xf]
    %v1431 = vld [vmem:[#allocation7 + $0xc8] sm:$0xf]
    %v1432 = vld [vmem:[#allocation7 + $0xcc] sm:$0xf]
    %v1433 = vld [vmem:[#allocation7 + $0xd0] sm:$0xf]
    %v1434 = vld [vmem:[#allocation7 + $0xd4] sm:$0xf]
    %v1435 = vld [vmem:[#allocation7 + $0xd8] sm:$0xf]
    %v1436 = vld [vmem:[#allocation7 + $0xdc] sm:$0xf]
    %v1437 = vld [vmem:[#allocation7 + $0xe0] sm:$0xf]
    %v1438 = vld [vmem:[#allocation7 + $0xe4] sm:$0xf]
    %v1439 = vld [vmem:[#allocation7 + $0xe8] sm:$0xf]
    %v1440 = vld [vmem:[#allocation7 + $0xec] sm:$0xf]
    %v1441 = vld [vmem:[#allocation7 + $0xf0] sm:$0xf]
    %v1442 = vld [vmem:[#allocation7 + $0xf4] sm:$0xf]
    %v1443 = vld [vmem:[#allocation7 + $0xf8] sm:$0xf]
    %v1444 = vld [vmem:[#allocation7 + $0xfc] sm:$0xf]
    %v1445 = vunpack.c.l.bf16 %v1381
    %v1446 = vunpack.c.l.bf16 %v1382
    %v1447 = vunpack.c.l.bf16 %v1383
    %v1448 = vunpack.c.l.bf16 %v1384
    %v1449 = vunpack.c.l.bf16 %v1385
    %v1450 = vunpack.c.l.bf16 %v1386
    %v1451 = vunpack.c.l.bf16 %v1387
    %v1452 = vunpack.c.l.bf16 %v1388
    %v1453 = vunpack.c.l.bf16 %v1389
    %v1454 = vunpack.c.l.bf16 %v1390
    %v1455 = vunpack.c.l.bf16 %v1391
    %v1456 = vunpack.c.l.bf16 %v1392
    %v1457 = vunpack.c.l.bf16 %v1393
    %v1458 = vunpack.c.l.bf16 %v1394
    %v1459 = vunpack.c.l.bf16 %v1395
    %v1460 = vunpack.c.l.bf16 %v1396
    %v1461 = vunpack.c.l.bf16 %v1397
    %v1462 = vunpack.c.l.bf16 %v1398
    %v1463 = vunpack.c.l.bf16 %v1399
    %v1464 = vunpack.c.l.bf16 %v1400
    %v1465 = vunpack.c.l.bf16 %v1401
    %v1466 = vunpack.c.l.bf16 %v1402
    %v1467 = vunpack.c.l.bf16 %v1403
    %v1468 = vunpack.c.l.bf16 %v1404
    %v1469 = vunpack.c.l.bf16 %v1405
    %v1470 = vunpack.c.l.bf16 %v1406
    %v1471 = vunpack.c.l.bf16 %v1407
    %v1472 = vunpack.c.l.bf16 %v1408
    %v1473 = vunpack.c.l.bf16 %v1409
    %v1474 = vunpack.c.l.bf16 %v1410
    %v1475 = vunpack.c.l.bf16 %v1411
    %v1476 = vunpack.c.l.bf16 %v1412
    %v1477 = vunpack.c.l.bf16 %v1413
    %v1478 = vunpack.c.l.bf16 %v1414
    %v1479 = vunpack.c.l.bf16 %v1415
    %v1480 = vunpack.c.l.bf16 %v1416
    %v1481 = vunpack.c.l.bf16 %v1417
    %v1482 = vunpack.c.l.bf16 %v1418
    %v1483 = vunpack.c.l.bf16 %v1419
    %v1484 = vunpack.c.l.bf16 %v1420
    %v1485 = vunpack.c.l.bf16 %v1421
    %v1486 = vunpack.c.l.bf16 %v1422
    %v1487 = vunpack.c.l.bf16 %v1423
    %v1488 = vunpack.c.l.bf16 %v1424
    %v1489 = vunpack.c.l.bf16 %v1425
    %v1490 = vunpack.c.l.bf16 %v1426
    %v1491 = vunpack.c.l.bf16 %v1427
    %v1492 = vunpack.c.l.bf16 %v1428
    %v1493 = vunpack.c.l.bf16 %v1429
    %v1494 = vunpack.c.l.bf16 %v1430
    %v1495 = vunpack.c.l.bf16 %v1431
    %v1496 = vunpack.c.l.bf16 %v1432
    %v1497 = vunpack.c.l.bf16 %v1433
    %v1498 = vunpack.c.l.bf16 %v1434
    %v1499 = vunpack.c.l.bf16 %v1435
    %v1500 = vunpack.c.l.bf16 %v1436
    %v1501 = vunpack.c.l.bf16 %v1437
    %v1502 = vunpack.c.l.bf16 %v1438
    %v1503 = vunpack.c.l.bf16 %v1439
    %v1504 = vunpack.c.l.bf16 %v1440
    %v1505 = vunpack.c.l.bf16 %v1441
    %v1506 = vunpack.c.l.bf16 %v1442
    %v1507 = vunpack.c.l.bf16 %v1443
    %v1508 = vunpack.c.l.bf16 %v1444
    %v1509 = vld [vmem:[%s8] sm:$0x1]
    %v1511 = vlaneseq
    %v1512 = vshrl.u32 %v1511, 7
    %v1513 = vsub.s32 0, %v1512
    %v1514 = vrot.slane %v1509, %v1513
    %1516 = vmatprep.subr.mxu0 0.0
    %1517 = vmatpush1.msra.mxu0 %v1445
    %1518 = vmatprep.subr.mxu0 0.0
    %1519 = vmatpush1.msra.mxu0 %v1446
    %1520 = vmatprep.subr.mxu0 0.0
    %1521 = vmatpush1.msra.mxu0 %v1447
    %1522 = vmatprep.subr.mxu0 0.0
    %1523 = vmatpush1.msra.mxu0 %v1448
    %1524 = vmatprep.subr.mxu0 0.0
    %1525 = vmatpush1.msra.mxu0 %v1449
    %1526 = vmatprep.subr.mxu0 0.0
    %1527 = vmatpush1.msra.mxu0 %v1450
    %1528 = vmatprep.subr.mxu0 0.0
    %1529 = vmatpush1.msra.mxu0 %v1451
    %1530 = vmatprep.subr.mxu0 0.0
    %1531 = vmatpush1.msra.mxu0 %v1452
    %1532 = vmatprep.subr.mxu0 0.0
    %1533 = vmatpush1.msra.mxu0 %v1453
    %1534 = vmatprep.subr.mxu0 0.0
    %1535 = vmatpush1.msra.mxu0 %v1454
    %1536 = vmatprep.subr.mxu0 0.0
    %1537 = vmatpush1.msra.mxu0 %v1455
    %1538 = vmatprep.subr.mxu0 0.0
    %1539 = vmatpush1.msra.mxu0 %v1456
    %1540 = vmatprep.subr.mxu0 0.0
    %1541 = vmatpush1.msra.mxu0 %v1457
    %1542 = vmatprep.subr.mxu0 0.0
    %1543 = vmatpush1.msra.mxu0 %v1458
    %1544 = vmatprep.subr.mxu0 0.0
    %1545 = vmatpush1.msra.mxu0 %v1459
    %1546 = vmatprep.subr.mxu0 0.0
    %1547 = vmatpush1.msra.mxu0 %v1460
    %1548 = vmatprep.subr.mxu0 0.0
    %1549 = vmatpush1.msra.mxu0 %v1461
    %1550 = vmatprep.subr.mxu0 0.0
    %1551 = vmatpush1.msra.mxu0 %v1462
    %1552 = vmatprep.subr.mxu0 0.0
    %1553 = vmatpush1.msra.mxu0 %v1463
    %1554 = vmatprep.subr.mxu0 0.0
    %1555 = vmatpush1.msra.mxu0 %v1464
    %1556 = vmatprep.subr.mxu0 0.0
    %1557 = vmatpush1.msra.mxu0 %v1465
    %1558 = vmatprep.subr.mxu0 0.0
    %1559 = vmatpush1.msra.mxu0 %v1466
    %1560 = vmatprep.subr.mxu0 0.0
    %1561 = vmatpush1.msra.mxu0 %v1467
    %1562 = vmatprep.subr.mxu0 0.0
    %1563 = vmatpush1.msra.mxu0 %v1468
    %1564 = vmatprep.subr.mxu0 0.0
    %1565 = vmatpush1.msra.mxu0 %v1469
    %1566 = vmatprep.subr.mxu0 0.0
    %1567 = vmatpush1.msra.mxu0 %v1470
    %1568 = vmatprep.subr.mxu0 0.0
    %1569 = vmatpush1.msra.mxu0 %v1471
    %1570 = vmatprep.subr.mxu0 0.0
    %1571 = vmatpush1.msra.mxu0 %v1472
    %1572 = vmatprep.subr.mxu0 0.0
    %1573 = vmatpush1.msra.mxu0 %v1473
    %1574 = vmatprep.subr.mxu0 0.0
    %1575 = vmatpush1.msra.mxu0 %v1474
    %1576 = vmatprep.subr.mxu0 0.0
    %1577 = vmatpush1.msra.mxu0 %v1475
    %1578 = vmatprep.subr.mxu0 0.0
    %1579 = vmatpush1.msra.mxu0 %v1476
    %1580 = vmatprep.mubr.f32.mxu0 %v1378
    %1581 = vmatmul.mubr.f32.gmra.mrb[0].mxu0 %v1377
    %v1582 = vpop.f32.mrb[0].mxu0
    %v1583 = vadd.f32 %v1514, %v1582
    %v1584 = vpop.f32.mrb[0].mxu0
    %1585 = vdwg.mxu0
    %1586 = vmatprep.subr.mxu0 0.0
    %1587 = vmatpush1.msra.mxu0 %v1477
    %1588 = vmatprep.subr.mxu0 0.0
    %1589 = vmatpush1.msra.mxu0 %v1478
    %1590 = vmatprep.subr.mxu0 0.0
    %1591 = vmatpush1.msra.mxu0 %v1479
    %1592 = vmatprep.subr.mxu0 0.0
    %1593 = vmatpush1.msra.mxu0 %v1480
    %1594 = vmatprep.subr.mxu0 0.0
    %1595 = vmatpush1.msra.mxu0 %v1481
    %1596 = vmatprep.subr.mxu0 0.0
    %1597 = vmatpush1.msra.mxu0 %v1482
    %1598 = vmatprep.subr.mxu0 0.0
    %1599 = vmatpush1.msra.mxu0 %v1483
    %1600 = vmatprep.subr.mxu0 0.0
    %1601 = vmatpush1.msra.mxu0 %v1484
    %1602 = vmatprep.subr.mxu0 0.0
    %1603 = vmatpush1.msra.mxu0 %v1485
    %1604 = vmatprep.subr.mxu0 0.0
    %1605 = vmatpush1.msra.mxu0 %v1486
    %1606 = vmatprep.subr.mxu0 0.0
    %1607 = vmatpush1.msra.mxu0 %v1487
    %1608 = vmatprep.subr.mxu0 0.0
    %1609 = vmatpush1.msra.mxu0 %v1488
    %1610 = vmatprep.subr.mxu0 0.0
    %1611 = vmatpush1.msra.mxu0 %v1489
    %1612 = vmatprep.subr.mxu0 0.0
    %1613 = vmatpush1.msra.mxu0 %v1490
    %1614 = vmatprep.subr.mxu0 0.0
    %1615 = vmatpush1.msra.mxu0 %v1491
    %1616 = vmatprep.subr.mxu0 0.0
    %1617 = vmatpush1.msra.mxu0 %v1492
    %1618 = vmatprep.subr.mxu0 0.0
    %1619 = vmatpush1.msra.mxu0 %v1493
    %1620 = vmatprep.subr.mxu0 0.0
    %1621 = vmatpush1.msra.mxu0 %v1494
    %1622 = vmatprep.subr.mxu0 0.0
    %1623 = vmatpush1.msra.mxu0 %v1495
    %1624 = vmatprep.subr.mxu0 0.0
    %1625 = vmatpush1.msra.mxu0 %v1496
    %1626 = vmatprep.subr.mxu0 0.0
    %1627 = vmatpush1.msra.mxu0 %v1497
    %1628 = vmatprep.subr.mxu0 0.0
    %1629 = vmatpush1.msra.mxu0 %v1498
    %1630 = vmatprep.subr.mxu0 0.0
    %1631 = vmatpush1.msra.mxu0 %v1499
    %1632 = vmatprep.subr.mxu0 0.0
    %1633 = vmatpush1.msra.mxu0 %v1500
    %1634 = vmatprep.subr.mxu0 0.0
    %1635 = vmatpush1.msra.mxu0 %v1501
    %1636 = vmatprep.subr.mxu0 0.0
    %1637 = vmatpush1.msra.mxu0 %v1502
    %1638 = vmatprep.subr.mxu0 0.0
    %1639 = vmatpush1.msra.mxu0 %v1503
    %1640 = vmatprep.subr.mxu0 0.0
    %1641 = vmatpush1.msra.mxu0 %v1504
    %1642 = vmatprep.subr.mxu0 0.0
    %1643 = vmatpush1.msra.mxu0 %v1505
    %1644 = vmatprep.subr.mxu0 0.0
    %1645 = vmatpush1.msra.mxu0 %v1506
    %1646 = vmatprep.subr.mxu0 0.0
    %1647 = vmatpush1.msra.mxu0 %v1507
    %1648 = vmatprep.subr.mxu0 0.0
    %1649 = vmatpush1.msra.mxu0 %v1508
    %1650 = vmatprep.mubr.f32.mxu0 %v1380
    %1651 = vmatmul.mubr.f32.gmra.mrb[0].mxu0 %v1379
    %v1652 = vpop.f32.mrb[0].mxu0
    %v1653 = vadd.f32 %v1583, %v1652
    %v1654 = vpop.f32.mrb[0].mxu0
    %1655 = vdwg.mxu0
    %1656 = vst [vmem:[#allocation8] sm:$0xff] %v1653
    // Predicated region
    $region50: #{dqn_forward.1} parent=1 // pred_check
      _
    $region51: #{dqn_forward.1} parent=1 // pred_check_branch
      %1658 = sbr.rel (0) target = $region53
    $region52: #{dqn_forward.1} parent=1 // pred_region
      %s1660 = ssub.s32 128, 128
      %1661 = vsyncadd [#allocation4], %s1660
      %s1663 = sshll.u32 [#allocation8], 4
      %s1664 = int_to_ptr.vmem [resolvable:$true] %s1663
      %1666 = dma.vmem_to_hbm [thread:$0]  %s1664, 128, %s9, [#allocation4]
    $region53: #{dqn_forward.1} parent=1 // pred_fallthru
      _
    // Predicated region
    $region54: #{dqn_forward.1} parent=1 // pred_check
      _
    $region55: #{dqn_forward.1} parent=1 // pred_check_branch
      %1668 = sbr.rel (0) target = $region57
    $region56: #{dqn_forward.1} parent=1 // pred_region
      %1669 = dma.done [#allocation4], 128
    $region57: #{dqn_forward.1} parent=1 // pred_fallthru
      _
    %1670 = vsyncpa [#allocation3], 1
    %1671 = vsyncpa [#allocation6], 1
    %1672 = vsyncpa [#allocation4], 1

</llo_original>
